<compile_context>
chip_gen: v7x
topology: tpu7x:2x2x1
jax: 0.10.0
libtpu: 0.0.40
codegen_flags: <defaults>
</compile_context>

<pallas_src>
import math
from functools import partial

import jax
import jax.numpy as jnp
from jax.experimental import pallas as pl
from jax.experimental.pallas import tpu as pltpu


# MXU operand dtype.  bf16 is the native MXU operand type on v5e/v6e/v7x
# (~2-3x matmul throughput vs emulated f32); accumulation is f32 regardless.
# Switch to jnp.float32 for bit-fidelity with the PyTorch reference.
_MXU_DTYPE = jnp.bfloat16
_LN_EPS = 1e-5          # nn.LayerNorm default


def _mx(a):
    return a.astype(_MXU_DTYPE)


def _layer_norm(x, gamma, beta, eps=_LN_EPS):
    mu = jnp.mean(x, axis=-1, keepdims=True)
    var = jnp.mean((x - mu) ** 2, axis=-1, keepdims=True)
    return (x - mu) * jax.lax.rsqrt(var + eps) * gamma + beta


def _headwise_layer_norm(x, gamma, beta, H, D, eps=_LN_EPS):
    """Per-head LayerNorm over D applied to head-packed (N, H*D) activations."""
    if H == 1:
        return _layer_norm(x, gamma, beta, eps)
    N, E = x.shape
    xh = x.reshape(N, H, D)
    mu = jnp.mean(xh, axis=-1, keepdims=True)
    var = jnp.mean((xh - mu) ** 2, axis=-1, keepdims=True)
    xn = ((xh - mu) * jax.lax.rsqrt(var + eps)).reshape(N, E)
    return xn * gamma + beta


# ----------------------------------------------------------------------------
# Fused Pallas kernel: one (stream, batch-block) tile of a MultiInputBlock
#   self_attn(x) + cross_attn2(z)  ->  FFN  ->  LayerNorm
# (cross_attn1's output is dead in the reference forward; the softmax path is
#  dead because its row-sum == 1 — see header comment.)
# ----------------------------------------------------------------------------
def _multi_block_kernel(H, D,
                        x_ref, z_ref, vp_ref,
                        wv1_ref, g1_ref, b1_ref,
                        wv2_ref, g2_ref, b2_ref,
                        w1_ref, c1_ref, w2_ref, c2_ref, gf_ref, cf_ref,
                        o_ref):
    TB, L, E = x_ref.shape
    N = TB * L
    x = x_ref[...].reshape(N, E)              # (TB*L, E) self-attn values stream
    z = z_ref[...].reshape(N, E)              # (TB*L, E) cross-attn2 values stream
    # values_pos_enc.sum(keys), tiled over heads, broadcast over the batch block.
    vpos = jnp.broadcast_to(vp_ref[...][None, :, :], (TB, L, E)).reshape(N, E)

    def attn(inp, wv_r, g_r, b_r):
        # All-head value projection in one (N,E)@(E,E) pass (block-diagonal
        # packed weights, pre-transposed to (in,out), pre-cast to bf16).
        v = jnp.dot(_mx(inp), wv_r[...], preferred_element_type=jnp.float32)
        # softmax row-sum == 1  =>  head output = LN(v + vpos) + v
        return _headwise_layer_norm(v + vpos, g_r[...], b_r[...], H, D) + v

    out1 = attn(x, wv1_ref, g1_ref, b1_ref)   # self_attn
    out2 = attn(z, wv2_ref, g2_ref, b2_ref)   # cross_attn2 (cross_attn1 is dead)

    # Feed-forward (dropout is identity at inference) + final LayerNorm(E).
    # TODO(synk): dropout omitted (eval-mode identity).
    h0 = out1 + out2
    hid = jnp.dot(_mx(h0), w1_ref[...], preferred_element_type=jnp.float32) + c1_ref[...]
    hid = jnp.maximum(hid, 0.0)
    y = jnp.dot(_mx(hid), w2_ref[...], preferred_element_type=jnp.float32) + c2_ref[...]
    y = _layer_norm(y, gf_ref[...], cf_ref[...])
    o_ref[...] = y.reshape(TB, L, E).astype(o_ref.dtype)


def _pick_batch_tile(B, L, target_rows=256):
    """Largest divisor of B with TB*L <= target_rows (MXU-row friendly)."""
    tb = 1
    for cand in range(1, B + 1):
        if B % cand == 0 and cand * L <= target_rows:
            tb = cand
    return tb


def multi_input_block_fused(bp, x_stack, vpos_tiled, num_heads, tb):
    """One MultiInputBlock (all 3 streams, all batches, all heads) in ONE pallas_call."""
    _, B, L, E = x_stack.shape
    D = E // num_heads
    nb = B // tb

    io_spec = pl.BlockSpec((None, tb, L, E), lambda s, b: (s, b, 0, 0))
    # z stream per output stream: treatment<-covariates, outcome<-treatments,
    # covariate<-outcomes, i.e. read stream (s+2) mod 3 — no materialized roll.
    z_spec = pl.BlockSpec((None, tb, L, E),
                          lambda s, b: (jnp.where(s == 0, 2, s - 1), b, 0, 0))
    mat_spec = pl.BlockSpec((None, E, E), lambda s, b: (s, 0, 0))
    vec_spec = pl.BlockSpec((None, 1, E), lambda s, b: (s, 0, 0))
    # For production E (~1024) with VMEM pressure, consider
    # pipeline_mode=pl.Buffered(1) on mat_spec (weight index is constant along b)
    # and/or raising vmem_limit_bytes.

    return pl.pallas_call(
        partial(_multi_block_kernel, num_heads, D),
        out_shape=jax.ShapeDtypeStruct((3, B, L, E), jnp.float32),
        grid=(3, nb),   # b innermost: per-stream weights stay resident across batch blocks
        in_specs=[
            io_spec,                                   # x (self-attn values)
            z_spec,                                    # z (cross-attn2 values, rolled view)
            pl.BlockSpec((L, E), lambda s, b: (0, 0)),  # values pos-enc sum, head-tiled
            mat_spec, vec_spec, vec_spec,              # self_attn packed Wv + per-head LN
            mat_spec, vec_spec, vec_spec,              # cross_attn2 packed Wv + per-head LN
            mat_spec, vec_spec, mat_spec, vec_spec,    # FFN
            vec_spec, vec_spec,                        # final LN
        ],
        out_specs=io_spec,
        compiler_params=pltpu.CompilerParams(
            dimension_semantics=("parallel", "parallel")),
    )(x_stack, x_stack, vpos_tiled,
      bp["wv1"], bp["g1"], bp["b1"],
      bp["wv2"], bp["g2"], bp["b2"],
      bp["w1"], bp["c1"], bp["w2"], bp["c2"], bp["gf"], bp["cf"])


# ----------------------------------------------------------------------------
# Plain-JAX glue (tiny at these shapes)
# ----------------------------------------------------------------------------
# TODO(synk): ReversibleNorm / LayerNorm1D source was not provided; implemented as
# RevIN-style instance normalization over the time axis (dim=-2) with affine params
# of shape (1, C) and an exact inverse for ReversibleNorm.
def reversible_norm_forward(x, weight, bias, eps=1e-5):
    mean = jnp.mean(x, axis=-2, keepdims=True)
    std = jnp.std(x, axis=-2, keepdims=True, ddof=1)
    x_n = (x - mean) / (std + eps)
    return x_n * weight + bias, (mean, std)


def reversible_norm_inverse(y, weight, bias, stats, eps=1e-5):
    mean, std = stats
    return (y - bias) / weight * (std + eps) + mean


def _linear(x, wb):
    w, b = wb
    return jnp.dot(x, w.T) + b


def get_pos_enc(L, w_enc, l_max):
    inds = jnp.arange(L)
    toeplitz = (inds[:, None] - inds[None, :]).astype(jnp.float32)
    toeplitz = jnp.clip(toeplitz, -l_max, l_max)
    pos = w_enc[None, None, :] * toeplitz[..., None]            # (L, L, Dh)
    pos = (pos - pos.mean()) / (jnp.std(pos, ddof=1) + 1e-6)    # torch.std -> unbiased
    return pos                                                  # (L, L, Dh)


def forward_future(params, cfg, covariate_history, treatment_history,
                   outcome_history, active_entries):
    treatments, outcomes, covariates = treatment_history, outcome_history, covariate_history
    B, L, _ = treatments.shape
    H = cfg["num_heads"]

    treatments, _ = reversible_norm_forward(treatments, params["norm_treat"]["w"], params["norm_treat"]["b"])
    outcomes, out_stats = reversible_norm_forward(outcomes, params["norm_out"]["w"], params["norm_out"]["b"])
    covariates, _ = reversible_norm_forward(covariates, params["norm_cov"]["w"], params["norm_cov"]["b"])

    treatments = _linear(treatments, params["init_treat"])
    outcomes = _linear(outcomes, params["init_out"])
    covariates = _linear(covariates, params["init_cov"])
    E = treatments.shape[-1]

    # keys_pos_enc only feeds the (dead) energy/softmax path -> never computed.
    values_pos_enc = get_pos_enc(L, params["values_pos_enc_w"], cfg["l_max"])   # (L, L, D)
    vpos = values_pos_enc.sum(axis=1)                    # (L, D)  sum over key axis j
    vpos_tiled = jnp.tile(vpos, (1, H)).astype(jnp.float32)   # (L, E) head-packed

    tb = _pick_batch_tile(B, L)
    x_stack = jnp.stack([treatments, outcomes, covariates]).astype(jnp.float32)  # (3, B, L, E)
    for bp in params["blocks"]:
        x_stack = multi_input_block_fused(bp, x_stack, vpos_tiled, H, tb)
    treatments, outcomes, covariates = x_stack[0], x_stack[1], x_stack[2]

    # covariates[active_entries.squeeze().bool()] = 0.0   (matches reference sense)
    active_bool = active_entries[..., 0] != 0                   # (B, L)
    covariates = jnp.where(active_bool[..., None], 0.0, covariates)

    out = treatments + outcomes + covariates                    # stack(...).sum(0)
    out = out / (2.0 + active_entries)
    out = jax.nn.elu(out)
    pred_outcomes = _linear(out, params["outcome_out"])
    pred_outcomes = reversible_norm_inverse(pred_outcomes, params["norm_out"]["w"],
                                            params["norm_out"]["b"], out_stats)
    return pred_outcomes, out


def causal_transformer_forward(params, cfg, covariate_history, treatment_history,
                               outcome_history, active_entries=None):
    if active_entries is None:
        # TODO(synk): reference samples random active entries; use all-ones here.
        active_entries = jnp.ones((*outcome_history.shape[:-1], 1), jnp.float32)
    pred, rep = forward_future(params, cfg, covariate_history, treatment_history,
                               outcome_history, active_entries)
    return pred[:, :-1, :], rep[:, :-1, :]


# ----------------------------------------------------------------------------
# Deterministic parameter initialization + host-side packing
# ----------------------------------------------------------------------------
def linear_params(key, in_dim, out_dim, bias=True):
    k1, k2 = jax.random.split(key)
    bound = 1.0 / math.sqrt(in_dim)
    w = jax.random.uniform(k1, (out_dim, in_dim), jnp.float32, -bound, bound)
    if bias:
        b = jax.random.uniform(k2, (out_dim,), jnp.float32, -bound, bound)
        return (w, b)
    return w


def pack_mha(key, E, H):
    """Pack per-head (D,D) value projections block-diagonally into (E,E), stored
    (in,out) and pre-cast to the MXU dtype so the kernel does x @ W directly.
    keys/queries projections are dead in the forward (softmax row-sum == 1)."""
    D = E // H
    wv = jnp.zeros((E, E), jnp.float32)
    gs, bs = [], []
    for h, hk in enumerate(jax.random.split(key, H)):
        sl = slice(h * D, (h + 1) * D)
        wv = wv.at[sl, sl].set(linear_params(hk, D, D, bias=False).T)
        gs.append(jnp.ones((D,), jnp.float32))    # per-head LayerNorm(D) affine
        bs.append(jnp.zeros((D,), jnp.float32))
    g = jnp.concatenate(gs).reshape(1, E)
    b = jnp.concatenate(bs).reshape(1, E)
    return wv.astype(_MXU_DTYPE), g, b


def single_block_params(key, E, H):
    k = jax.random.split(key, 4)
    wv1, g1, b1 = pack_mha(k[0], E, H)    # self_attn
    # k[1] corresponds to cross_attn1, whose output is dead in the reference
    # forward (immediately overwritten by cross_attn2) -> omitted.
    wv2, g2, b2 = pack_mha(k[2], E, H)    # cross_attn2
    kf = jax.random.split(k[3], 2)
    w1, c1 = linear_params(kf[0], E, E)
    w2, c2 = linear_params(kf[1], E, E)
    return {"wv1": wv1, "g1": g1, "b1": b1,
            "wv2": wv2, "g2": g2, "b2": b2,
            "w1": w1.T.astype(_MXU_DTYPE), "c1": c1.reshape(1, E),
            "w2": w2.T.astype(_MXU_DTYPE), "c2": c2.reshape(1, E),
            "gf": jnp.ones((1, E), jnp.float32), "cf": jnp.zeros((1, E), jnp.float32)}


def multi_block_params(key, E, H):
    k = jax.random.split(key, 3)
    per_stream = [single_block_params(k[i], E, H) for i in range(3)]  # treatment, outcome, covariate
    return {name: jnp.stack([ps[name] for ps in per_stream]) for name in per_stream[0]}


def causal_transformer_params(key, cov_size, trt_size, out_size, hidden, num_layers, num_heads):
    head_dim = hidden // num_heads
    keys = jax.random.split(key, 6 + num_layers)
    return {
        "values_pos_enc_w": jax.random.normal(keys[0], (head_dim,), jnp.float32),
        "keys_pos_enc_w": jax.random.normal(keys[1], (head_dim,), jnp.float32),  # dead in forward
        "init_treat": linear_params(keys[2], trt_size, hidden),
        "init_out": linear_params(keys[3], out_size, hidden),
        "init_cov": linear_params(keys[4], cov_size, hidden),
        "outcome_out": linear_params(keys[5], hidden, out_size),
        "norm_treat": {"w": jnp.ones((1, trt_size), jnp.float32), "b": jnp.zeros((1, trt_size), jnp.float32)},
        "norm_out": {"w": jnp.ones((1, out_size), jnp.float32), "b": jnp.zeros((1, out_size), jnp.float32)},
        "norm_cov": {"w": jnp.ones((1, cov_size), jnp.float32), "b": jnp.zeros((1, cov_size), jnp.float32)},
        "blocks": [multi_block_params(keys[6 + i], hidden, num_heads) for i in range(num_layers)],
    }


# ----------------------------------------------------------------------------
if __name__ == "__main__":
    key = jax.random.PRNGKey(0)
    B, L = 2, 8
    cov_size, trt_size, out_size = 3, 4, 2
    hidden, num_layers, num_heads, l_max = 32, 1, 1, 15
    cfg = {"l_max": l_max, "num_heads": num_heads}

    pk, dk = jax.random.split(key)
    params = causal_transformer_params(pk, cov_size, trt_size, out_size,
                                       hidden, num_layers, num_heads)

    d = jax.random.split(dk, 3)
    covariate_history = jax.random.normal(d[0], (B, L, cov_size), jnp.float32)
    treatment_history = jax.random.normal(d[1], (B, L, trt_size), jnp.float32)
    outcome_history = jax.random.normal(d[2], (B, L, out_size), jnp.float32)
    # deterministic active entries: first 5 steps active, rest inactive
    active_entries = jnp.concatenate(
        [jnp.ones((B, 5, 1), jnp.float32), jnp.zeros((B, L - 5, 1), jnp.float32)], axis=1)

    fwd = jax.jit(partial(causal_transformer_forward, params, cfg))
    pred_outcomes, representations = fwd(covariate_history, treatment_history,
                                         outcome_history, active_entries)
    jax.block_until_ready((pred_outcomes, representations))
    assert pred_outcomes.shape == (B, L - 1, out_size)
    assert representations.shape == (B, L - 1, hidden)
    assert bool(jnp.all(jnp.isfinite(pred_outcomes))) and bool(jnp.all(jnp.isfinite(representations)))
    print("KERNEL_OK")
</pallas_src>

<mosaic_0001>
module attributes {stable_mosaic.version = 11 : i64} {
  func.func @_multi_block_kernel(%arg0: i32, %arg1: i32, %arg2: memref<1x2x8x32xf32, #tpu.memory_space<vmem>>, %arg3: memref<1x2x8x32xf32, #tpu.memory_space<vmem>>, %arg4: memref<8x32xf32, #tpu.memory_space<vmem>>, %arg5: memref<1x32x32xbf16, #tpu.memory_space<vmem>>, %arg6: memref<1x1x32xf32, #tpu.memory_space<vmem>>, %arg7: memref<1x1x32xf32, #tpu.memory_space<vmem>>, %arg8: memref<1x32x32xbf16, #tpu.memory_space<vmem>>, %arg9: memref<1x1x32xf32, #tpu.memory_space<vmem>>, %arg10: memref<1x1x32xf32, #tpu.memory_space<vmem>>, %arg11: memref<1x32x32xbf16, #tpu.memory_space<vmem>>, %arg12: memref<1x1x32xf32, #tpu.memory_space<vmem>>, %arg13: memref<1x32x32xbf16, #tpu.memory_space<vmem>>, %arg14: memref<1x1x32xf32, #tpu.memory_space<vmem>>, %arg15: memref<1x1x32xf32, #tpu.memory_space<vmem>>, %arg16: memref<1x1x32xf32, #tpu.memory_space<vmem>>, %arg17: memref<1x2x8x32xf32, #tpu.memory_space<vmem>>) attributes {dimension_semantics = [#tpu.dimension_semantics<parallel>, #tpu.dimension_semantics<parallel>], iteration_bounds = array<i64: 3, 1>, scalar_prefetch = 0 : i64, scratch_operands = 0 : i64, tpu.core_type = #tpu.core_type<tc>, window_params = [{transform_indices = @transform_0, window_bounds = array<i64: 1, 2, 8, 32>}, {transform_indices = @transform_1, window_bounds = array<i64: 1, 2, 8, 32>}, {pipeline_mode = #tpu.pipeline_mode<synchronous>, transform_indices = @transform_2, window_bounds = array<i64: 8, 32>}, {transform_indices = @transform_3, window_bounds = array<i64: 1, 32, 32>}, {transform_indices = @transform_4, window_bounds = array<i64: 1, 1, 32>}, {transform_indices = @transform_5, window_bounds = array<i64: 1, 1, 32>}, {transform_indices = @transform_6, window_bounds = array<i64: 1, 32, 32>}, {transform_indices = @transform_7, window_bounds = array<i64: 1, 1, 32>}, {transform_indices = @transform_8, window_bounds = array<i64: 1, 1, 32>}, {transform_indices = @transform_9, window_bounds = array<i64: 1, 32, 32>}, {transform_indices = @transform_10, window_bounds = array<i64: 1, 1, 32>}, {transform_indices = @transform_11, window_bounds = array<i64: 1, 32, 32>}, {transform_indices = @transform_12, window_bounds = array<i64: 1, 1, 32>}, {transform_indices = @transform_13, window_bounds = array<i64: 1, 1, 32>}, {transform_indices = @transform_14, window_bounds = array<i64: 1, 1, 32>}, {transform_indices = @transform_15, window_bounds = array<i64: 1, 2, 8, 32>}]} {
    %c0 = arith.constant 0 : index
    %c0_0 = arith.constant 0 : index
    %c0_1 = arith.constant 0 : index
    %c0_2 = arith.constant 0 : index
    %0 = vector.load %arg2[%c0, %c0_0, %c0_1, %c0_2] : memref<1x2x8x32xf32, #tpu.memory_space<vmem>>, vector<1x2x8x32xf32>
    %1 = vector.shape_cast %0 : vector<1x2x8x32xf32> to vector<2x8x32xf32>
    %2 = vector.shape_cast %1 : vector<2x8x32xf32> to vector<16x32xf32>
    %c0_3 = arith.constant 0 : index
    %c0_4 = arith.constant 0 : index
    %c0_5 = arith.constant 0 : index
    %c0_6 = arith.constant 0 : index
    %3 = vector.load %arg3[%c0_3, %c0_4, %c0_5, %c0_6] : memref<1x2x8x32xf32, #tpu.memory_space<vmem>>, vector<1x2x8x32xf32>
    %4 = vector.shape_cast %3 : vector<1x2x8x32xf32> to vector<2x8x32xf32>
    %5 = vector.shape_cast %4 : vector<2x8x32xf32> to vector<16x32xf32>
    %c0_7 = arith.constant 0 : index
    %c0_8 = arith.constant 0 : index
    %6 = vector.load %arg4[%c0_7, %c0_8] : memref<8x32xf32, #tpu.memory_space<vmem>>, vector<8x32xf32>
    %7 = vector.shape_cast %6 : vector<8x32xf32> to vector<1x8x32xf32>
    %8 = vector.shape_cast %7 : vector<1x8x32xf32> to vector<1x8x32xf32>
    %9 = vector.broadcast %8 : vector<1x8x32xf32> to vector<2x8x32xf32>
    %10 = vector.shape_cast %9 : vector<2x8x32xf32> to vector<16x32xf32>
    %11 = arith.truncf %2 : vector<16x32xf32> to vector<16x32xbf16>
    %c0_9 = arith.constant 0 : index
    %c0_10 = arith.constant 0 : index
    %c0_11 = arith.constant 0 : index
    %12 = vector.load %arg5[%c0_9, %c0_10, %c0_11] : memref<1x32x32xbf16, #tpu.memory_space<vmem>>, vector<1x32x32xbf16>
    %13 = vector.shape_cast %12 : vector<1x32x32xbf16> to vector<32x32xbf16>
    %cst = arith.constant dense<0.000000e+00> : vector<16x32xf32>
    %14 = tpu.matmul %11, %13, %cst {dimension_numbers = #tpu.dot_dimension_numbers<[1], [0], [0], [1], [0, 0, 1, 1], [], []>} : vector<16x32xbf16>, vector<32x32xbf16>, vector<16x32xf32> -> vector<16x32xf32>
    %15 = arith.addf %14, %10 : vector<16x32xf32>
    %c0_12 = arith.constant 0 : index
    %c0_13 = arith.constant 0 : index
    %c0_14 = arith.constant 0 : index
    %16 = vector.load %arg6[%c0_12, %c0_13, %c0_14] : memref<1x1x32xf32, #tpu.memory_space<vmem>>, vector<1x1x32xf32>
    %17 = vector.shape_cast %16 : vector<1x1x32xf32> to vector<1x32xf32>
    %c0_15 = arith.constant 0 : index
    %c0_16 = arith.constant 0 : index
    %c0_17 = arith.constant 0 : index
    %18 = vector.load %arg7[%c0_15, %c0_16, %c0_17] : memref<1x1x32xf32, #tpu.memory_space<vmem>>, vector<1x1x32xf32>
    %19 = vector.shape_cast %18 : vector<1x1x32xf32> to vector<1x32xf32>
    %cst_18 = arith.constant dense<0.000000e+00> : vector<16xf32>
    %20 = vector.multi_reduction <add>, %15, %cst_18 [1] : vector<16x32xf32> to vector<16xf32>
    %21 = vector.shape_cast %20 : vector<16xf32> to vector<16x1xf32>
    %cst_19 = arith.constant 3.200000e+01 : f32
    %22 = vector.broadcast %cst_19 : f32 to vector<16x1xf32>
    %23 = arith.divf %21, %22 : vector<16x1xf32>
    %24 = vector.broadcast %23 : vector<16x1xf32> to vector<16x32xf32>
    %25 = arith.subf %15, %24 : vector<16x32xf32>
    %26 = arith.mulf %25, %25 : vector<16x32xf32>
    %cst_20 = arith.constant dense<0.000000e+00> : vector<16xf32>
    %27 = vector.multi_reduction <add>, %26, %cst_20 [1] : vector<16x32xf32> to vector<16xf32>
    %28 = vector.shape_cast %27 : vector<16xf32> to vector<16x1xf32>
    %cst_21 = arith.constant 3.200000e+01 : f32
    %29 = vector.broadcast %cst_21 : f32 to vector<16x1xf32>
    %30 = arith.divf %28, %29 : vector<16x1xf32>
    %31 = vector.broadcast %23 : vector<16x1xf32> to vector<16x32xf32>
    %32 = arith.subf %15, %31 : vector<16x32xf32>
    %cst_22 = arith.constant 9.99999974E-6 : f32
    %33 = vector.broadcast %cst_22 : f32 to vector<16x1xf32>
    %34 = arith.addf %30, %33 : vector<16x1xf32>
    %35 = math.rsqrt %34 : vector<16x1xf32>
    %36 = vector.broadcast %35 : vector<16x1xf32> to vector<16x32xf32>
    %37 = arith.mulf %32, %36 : vector<16x32xf32>
    %38 = vector.broadcast %17 : vector<1x32xf32> to vector<16x32xf32>
    %39 = arith.mulf %37, %38 : vector<16x32xf32>
    %40 = vector.broadcast %19 : vector<1x32xf32> to vector<16x32xf32>
    %41 = arith.addf %39, %40 : vector<16x32xf32>
    %42 = arith.addf %41, %14 : vector<16x32xf32>
    %43 = arith.truncf %5 : vector<16x32xf32> to vector<16x32xbf16>
    %c0_23 = arith.constant 0 : index
    %c0_24 = arith.constant 0 : index
    %c0_25 = arith.constant 0 : index
    %44 = vector.load %arg8[%c0_23, %c0_24, %c0_25] : memref<1x32x32xbf16, #tpu.memory_space<vmem>>, vector<1x32x32xbf16>
    %45 = vector.shape_cast %44 : vector<1x32x32xbf16> to vector<32x32xbf16>
    %cst_26 = arith.constant dense<0.000000e+00> : vector<16x32xf32>
    %46 = tpu.matmul %43, %45, %cst_26 {dimension_numbers = #tpu.dot_dimension_numbers<[1], [0], [0], [1], [0, 0, 1, 1], [], []>} : vector<16x32xbf16>, vector<32x32xbf16>, vector<16x32xf32> -> vector<16x32xf32>
    %47 = arith.addf %46, %10 : vector<16x32xf32>
    %c0_27 = arith.constant 0 : index
    %c0_28 = arith.constant 0 : index
    %c0_29 = arith.constant 0 : index
    %48 = vector.load %arg9[%c0_27, %c0_28, %c0_29] : memref<1x1x32xf32, #tpu.memory_space<vmem>>, vector<1x1x32xf32>
    %49 = vector.shape_cast %48 : vector<1x1x32xf32> to vector<1x32xf32>
    %c0_30 = arith.constant 0 : index
    %c0_31 = arith.constant 0 : index
    %c0_32 = arith.constant 0 : index
    %50 = vector.load %arg10[%c0_30, %c0_31, %c0_32] : memref<1x1x32xf32, #tpu.memory_space<vmem>>, vector<1x1x32xf32>
    %51 = vector.shape_cast %50 : vector<1x1x32xf32> to vector<1x32xf32>
    %cst_33 = arith.constant dense<0.000000e+00> : vector<16xf32>
    %52 = vector.multi_reduction <add>, %47, %cst_33 [1] : vector<16x32xf32> to vector<16xf32>
    %53 = vector.shape_cast %52 : vector<16xf32> to vector<16x1xf32>
    %cst_34 = arith.constant 3.200000e+01 : f32
    %54 = vector.broadcast %cst_34 : f32 to vector<16x1xf32>
    %55 = arith.divf %53, %54 : vector<16x1xf32>
    %56 = vector.broadcast %55 : vector<16x1xf32> to vector<16x32xf32>
    %57 = arith.subf %47, %56 : vector<16x32xf32>
    %58 = arith.mulf %57, %57 : vector<16x32xf32>
    %cst_35 = arith.constant dense<0.000000e+00> : vector<16xf32>
    %59 = vector.multi_reduction <add>, %58, %cst_35 [1] : vector<16x32xf32> to vector<16xf32>
    %60 = vector.shape_cast %59 : vector<16xf32> to vector<16x1xf32>
    %cst_36 = arith.constant 3.200000e+01 : f32
    %61 = vector.broadcast %cst_36 : f32 to vector<16x1xf32>
    %62 = arith.divf %60, %61 : vector<16x1xf32>
    %63 = vector.broadcast %55 : vector<16x1xf32> to vector<16x32xf32>
    %64 = arith.subf %47, %63 : vector<16x32xf32>
    %cst_37 = arith.constant 9.99999974E-6 : f32
    %65 = vector.broadcast %cst_37 : f32 to vector<16x1xf32>
    %66 = arith.addf %62, %65 : vector<16x1xf32>
    %67 = math.rsqrt %66 : vector<16x1xf32>
    %68 = vector.broadcast %67 : vector<16x1xf32> to vector<16x32xf32>
    %69 = arith.mulf %64, %68 : vector<16x32xf32>
    %70 = vector.broadcast %49 : vector<1x32xf32> to vector<16x32xf32>
    %71 = arith.mulf %69, %70 : vector<16x32xf32>
    %72 = vector.broadcast %51 : vector<1x32xf32> to vector<16x32xf32>
    %73 = arith.addf %71, %72 : vector<16x32xf32>
    %74 = arith.addf %73, %46 : vector<16x32xf32>
    %75 = arith.addf %42, %74 : vector<16x32xf32>
    %76 = arith.truncf %75 : vector<16x32xf32> to vector<16x32xbf16>
    %c0_38 = arith.constant 0 : index
    %c0_39 = arith.constant 0 : index
    %c0_40 = arith.constant 0 : index
    %77 = vector.load %arg11[%c0_38, %c0_39, %c0_40] : memref<1x32x32xbf16, #tpu.memory_space<vmem>>, vector<1x32x32xbf16>
    %78 = vector.shape_cast %77 : vector<1x32x32xbf16> to vector<32x32xbf16>
    %cst_41 = arith.constant dense<0.000000e+00> : vector<16x32xf32>
    %79 = tpu.matmul %76, %78, %cst_41 {dimension_numbers = #tpu.dot_dimension_numbers<[1], [0], [0], [1], [0, 0, 1, 1], [], []>} : vector<16x32xbf16>, vector<32x32xbf16>, vector<16x32xf32> -> vector<16x32xf32>
    %c0_42 = arith.constant 0 : index
    %c0_43 = arith.constant 0 : index
    %c0_44 = arith.constant 0 : index
    %80 = vector.load %arg12[%c0_42, %c0_43, %c0_44] : memref<1x1x32xf32, #tpu.memory_space<vmem>>, vector<1x1x32xf32>
    %81 = vector.shape_cast %80 : vector<1x1x32xf32> to vector<1x32xf32>
    %82 = vector.broadcast %81 : vector<1x32xf32> to vector<16x32xf32>
    %83 = arith.addf %79, %82 : vector<16x32xf32>
    %cst_45 = arith.constant 0.000000e+00 : f32
    %84 = vector.broadcast %cst_45 : f32 to vector<16x32xf32>
    %85 = arith.maximumf %83, %84 : vector<16x32xf32>
    %86 = arith.truncf %85 : vector<16x32xf32> to vector<16x32xbf16>
    %c0_46 = arith.constant 0 : index
    %c0_47 = arith.constant 0 : index
    %c0_48 = arith.constant 0 : index
    %87 = vector.load %arg13[%c0_46, %c0_47, %c0_48] : memref<1x32x32xbf16, #tpu.memory_space<vmem>>, vector<1x32x32xbf16>
    %88 = vector.shape_cast %87 : vector<1x32x32xbf16> to vector<32x32xbf16>
    %cst_49 = arith.constant dense<0.000000e+00> : vector<16x32xf32>
    %89 = tpu.matmul %86, %88, %cst_49 {dimension_numbers = #tpu.dot_dimension_numbers<[1], [0], [0], [1], [0, 0, 1, 1], [], []>} : vector<16x32xbf16>, vector<32x32xbf16>, vector<16x32xf32> -> vector<16x32xf32>
    %c0_50 = arith.constant 0 : index
    %c0_51 = arith.constant 0 : index
    %c0_52 = arith.constant 0 : index
    %90 = vector.load %arg14[%c0_50, %c0_51, %c0_52] : memref<1x1x32xf32, #tpu.memory_space<vmem>>, vector<1x1x32xf32>
    %91 = vector.shape_cast %90 : vector<1x1x32xf32> to vector<1x32xf32>
    %92 = vector.broadcast %91 : vector<1x32xf32> to vector<16x32xf32>
    %93 = arith.addf %89, %92 : vector<16x32xf32>
    %c0_53 = arith.constant 0 : index
    %c0_54 = arith.constant 0 : index
    %c0_55 = arith.constant 0 : index
    %94 = vector.load %arg15[%c0_53, %c0_54, %c0_55] : memref<1x1x32xf32, #tpu.memory_space<vmem>>, vector<1x1x32xf32>
    %95 = vector.shape_cast %94 : vector<1x1x32xf32> to vector<1x32xf32>
    %c0_56 = arith.constant 0 : index
    %c0_57 = arith.constant 0 : index
    %c0_58 = arith.constant 0 : index
    %96 = vector.load %arg16[%c0_56, %c0_57, %c0_58] : memref<1x1x32xf32, #tpu.memory_space<vmem>>, vector<1x1x32xf32>
    %97 = vector.shape_cast %96 : vector<1x1x32xf32> to vector<1x32xf32>
    %cst_59 = arith.constant dense<0.000000e+00> : vector<16xf32>
    %98 = vector.multi_reduction <add>, %93, %cst_59 [1] : vector<16x32xf32> to vector<16xf32>
    %99 = vector.shape_cast %98 : vector<16xf32> to vector<16x1xf32>
    %cst_60 = arith.constant 3.200000e+01 : f32
    %100 = vector.broadcast %cst_60 : f32 to vector<16x1xf32>
    %101 = arith.divf %99, %100 : vector<16x1xf32>
    %102 = vector.broadcast %101 : vector<16x1xf32> to vector<16x32xf32>
    %103 = arith.subf %93, %102 : vector<16x32xf32>
    %104 = arith.mulf %103, %103 : vector<16x32xf32>
    %cst_61 = arith.constant dense<0.000000e+00> : vector<16xf32>
    %105 = vector.multi_reduction <add>, %104, %cst_61 [1] : vector<16x32xf32> to vector<16xf32>
    %106 = vector.shape_cast %105 : vector<16xf32> to vector<16x1xf32>
    %cst_62 = arith.constant 3.200000e+01 : f32
    %107 = vector.broadcast %cst_62 : f32 to vector<16x1xf32>
    %108 = arith.divf %106, %107 : vector<16x1xf32>
    %109 = vector.broadcast %101 : vector<16x1xf32> to vector<16x32xf32>
    %110 = arith.subf %93, %109 : vector<16x32xf32>
    %cst_63 = arith.constant 9.99999974E-6 : f32
    %111 = vector.broadcast %cst_63 : f32 to vector<16x1xf32>
    %112 = arith.addf %108, %111 : vector<16x1xf32>
    %113 = math.rsqrt %112 : vector<16x1xf32>
    %114 = vector.broadcast %113 : vector<16x1xf32> to vector<16x32xf32>
    %115 = arith.mulf %110, %114 : vector<16x32xf32>
    %116 = vector.broadcast %95 : vector<1x32xf32> to vector<16x32xf32>
    %117 = arith.mulf %115, %116 : vector<16x32xf32>
    %118 = vector.broadcast %97 : vector<1x32xf32> to vector<16x32xf32>
    %119 = arith.addf %117, %118 : vector<16x32xf32>
    %120 = vector.shape_cast %119 : vector<16x32xf32> to vector<2x8x32xf32>
    %c0_64 = arith.constant 0 : index
    %c0_65 = arith.constant 0 : index
    %c0_66 = arith.constant 0 : index
    %c0_67 = arith.constant 0 : index
    %121 = vector.load %arg17[%c0_64, %c0_65, %c0_66, %c0_67] : memref<1x2x8x32xf32, #tpu.memory_space<vmem>>, vector<1x2x8x32xf32>
    %122 = vector.shape_cast %121 : vector<1x2x8x32xf32> to vector<2x8x32xf32>
    %123 = vector.shape_cast %120 : vector<2x8x32xf32> to vector<1x2x8x32xf32>
    tpu.vector_store %arg17[%c0_64, %c0_65, %c0_66, %c0_67], %123 {strides = array<i32>} : memref<1x2x8x32xf32, #tpu.memory_space<vmem>>, vector<1x2x8x32xf32>,
    return
  }
  func.func @transform_0(%arg0: i32, %arg1: i32) -> (i32, i32, i32, i32) {
    %c0_i32 = arith.constant 0 : i32
    %c0_i32_0 = arith.constant 0 : i32
    %c0_i32_1 = arith.constant 0 : i32
    return %arg0, %arg1, %c0_i32, %c0_i32_0 : i32, i32, i32, i32
  }
  func.func @transform_1(%arg0: i32, %arg1: i32) -> (i32, i32, i32, i32) {
    %c0_i32 = arith.constant 0 : i32
    %0 = arith.cmpi eq, %arg0, %c0_i32 : i32
    %c1_i32 = arith.constant 1 : i32
    %1 = arith.subi %arg0, %c1_i32 : i32
    %c2_i32 = arith.constant 2 : i32
    %2 = arith.select %0, %c2_i32, %1 : i32
    %c0_i32_0 = arith.constant 0 : i32
    %c0_i32_1 = arith.constant 0 : i32
    %c0_i32_2 = arith.constant 0 : i32
    return %2, %arg1, %c0_i32_0, %c0_i32_1 : i32, i32, i32, i32
  }
  func.func @transform_2(%arg0: i32, %arg1: i32) -> (i32, i32) {
    %c0_i32 = arith.constant 0 : i32
    %c0_i32_0 = arith.constant 0 : i32
    %c0_i32_1 = arith.constant 0 : i32
    return %c0_i32, %c0_i32_0 : i32, i32
  }
  func.func @transform_3(%arg0: i32, %arg1: i32) -> (i32, i32, i32) {
    %c0_i32 = arith.constant 0 : i32
    %c0_i32_0 = arith.constant 0 : i32
    %c0_i32_1 = arith.constant 0 : i32
    return %arg0, %c0_i32, %c0_i32_0 : i32, i32, i32
  }
  func.func @transform_4(%arg0: i32, %arg1: i32) -> (i32, i32, i32) {
    %c0_i32 = arith.constant 0 : i32
    %c0_i32_0 = arith.constant 0 : i32
    %c0_i32_1 = arith.constant 0 : i32
    return %arg0, %c0_i32, %c0_i32_0 : i32, i32, i32
  }
  func.func @transform_5(%arg0: i32, %arg1: i32) -> (i32, i32, i32) {
    %c0_i32 = arith.constant 0 : i32
    %c0_i32_0 = arith.constant 0 : i32
    %c0_i32_1 = arith.constant 0 : i32
    return %arg0, %c0_i32, %c0_i32_0 : i32, i32, i32
  }
  func.func @transform_6(%arg0: i32, %arg1: i32) -> (i32, i32, i32) {
    %c0_i32 = arith.constant 0 : i32
    %c0_i32_0 = arith.constant 0 : i32
    %c0_i32_1 = arith.constant 0 : i32
    return %arg0, %c0_i32, %c0_i32_0 : i32, i32, i32
  }
  func.func @transform_7(%arg0: i32, %arg1: i32) -> (i32, i32, i32) {
    %c0_i32 = arith.constant 0 : i32
    %c0_i32_0 = arith.constant 0 : i32
    %c0_i32_1 = arith.constant 0 : i32
    return %arg0, %c0_i32, %c0_i32_0 : i32, i32, i32
  }
  func.func @transform_8(%arg0: i32, %arg1: i32) -> (i32, i32, i32) {
    %c0_i32 = arith.constant 0 : i32
    %c0_i32_0 = arith.constant 0 : i32
    %c0_i32_1 = arith.constant 0 : i32
    return %arg0, %c0_i32, %c0_i32_0 : i32, i32, i32
  }
  func.func @transform_9(%arg0: i32, %arg1: i32) -> (i32, i32, i32) {
    %c0_i32 = arith.constant 0 : i32
    %c0_i32_0 = arith.constant 0 : i32
    %c0_i32_1 = arith.constant 0 : i32
    return %arg0, %c0_i32, %c0_i32_0 : i32, i32, i32
  }
  func.func @transform_10(%arg0: i32, %arg1: i32) -> (i32, i32, i32) {
    %c0_i32 = arith.constant 0 : i32
    %c0_i32_0 = arith.constant 0 : i32
    %c0_i32_1 = arith.constant 0 : i32
    return %arg0, %c0_i32, %c0_i32_0 : i32, i32, i32
  }
  func.func @transform_11(%arg0: i32, %arg1: i32) -> (i32, i32, i32) {
    %c0_i32 = arith.constant 0 : i32
    %c0_i32_0 = arith.constant 0 : i32
    %c0_i32_1 = arith.constant 0 : i32
    return %arg0, %c0_i32, %c0_i32_0 : i32, i32, i32
  }
  func.func @transform_12(%arg0: i32, %arg1: i32) -> (i32, i32, i32) {
    %c0_i32 = arith.constant 0 : i32
    %c0_i32_0 = arith.constant 0 : i32
    %c0_i32_1 = arith.constant 0 : i32
    return %arg0, %c0_i32, %c0_i32_0 : i32, i32, i32
  }
  func.func @transform_13(%arg0: i32, %arg1: i32) -> (i32, i32, i32) {
    %c0_i32 = arith.constant 0 : i32
    %c0_i32_0 = arith.constant 0 : i32
    %c0_i32_1 = arith.constant 0 : i32
    return %arg0, %c0_i32, %c0_i32_0 : i32, i32, i32
  }
  func.func @transform_14(%arg0: i32, %arg1: i32) -> (i32, i32, i32) {
    %c0_i32 = arith.constant 0 : i32
    %c0_i32_0 = arith.constant 0 : i32
    %c0_i32_1 = arith.constant 0 : i32
    return %arg0, %c0_i32, %c0_i32_0 : i32, i32, i32
  }
  func.func @transform_15(%arg0: i32, %arg1: i32) -> (i32, i32, i32, i32) {
    %c0_i32 = arith.constant 0 : i32
    %c0_i32_0 = arith.constant 0 : i32
    %c0_i32_1 = arith.constant 0 : i32
    return %arg0, %arg1, %c0_i32, %c0_i32_0 : i32, i32, i32, i32
  }
}

</mosaic_0001>

<llo_original>
// kernel: causal_transformer_forward.1
$region0: #{causal_transformer_forward.1}
  #allocation0 [shape = 'u32[]', space=smem, size = 0x4, offset = 0x4, fixed_abs, tag = 'smem constant byte address 0x4 - core index']
  #allocation1 [shape = 'u32[144,128]{1,0:T(1,128)}', space=vmem, size = 0x12000, scoped, tag = 'internal scratch']
  %s0 = inlined_call_operand.vmem [shape: f32[3,2,8,32], index: 0, kind: input, shape index: {}, may-alias: {0,1}]
  %s1 = inlined_call_operand.vmem [shape: f32[3,2,8,32], index: 1, kind: input, shape index: {}, may-alias: {0,1}]
  %s2 = inlined_call_operand.vmem [shape: f32[8,32], index: 2, kind: input, shape index: {}]
  %s3 = inlined_call_operand.vmem [shape: bf16[3,32,32], index: 3, kind: input, shape index: {}]
  %s4 = inlined_call_operand.vmem [shape: f32[3,1,32], index: 4, kind: input, shape index: {}, may-alias: {4,7,13}]
  %s5 = inlined_call_operand.vmem [shape: f32[3,1,32], index: 5, kind: input, shape index: {}, may-alias: {5,8,14}]
  %s6 = inlined_call_operand.vmem [shape: bf16[3,32,32], index: 6, kind: input, shape index: {}]
  %s7 = inlined_call_operand.vmem [shape: f32[3,1,32], index: 7, kind: input, shape index: {}, may-alias: {4,7,13}]
  %s8 = inlined_call_operand.vmem [shape: f32[3,1,32], index: 8, kind: input, shape index: {}, may-alias: {5,8,14}]
  %s9 = inlined_call_operand.vmem [shape: bf16[3,32,32], index: 9, kind: input, shape index: {}]
  %s10 = inlined_call_operand.vmem [shape: f32[3,1,32], index: 10, kind: input, shape index: {}]
  %s11 = inlined_call_operand.vmem [shape: bf16[3,32,32], index: 11, kind: input, shape index: {}]
  %s12 = inlined_call_operand.vmem [shape: f32[3,1,32], index: 12, kind: input, shape index: {}]
  %s13 = inlined_call_operand.vmem [shape: f32[3,1,32], index: 13, kind: input, shape index: {}, may-alias: {4,7,13}]
  %s14 = inlined_call_operand.vmem [shape: f32[3,1,32], index: 14, kind: input, shape index: {}, may-alias: {5,8,14}]
  %s15 = inlined_call_operand.vmem [shape: f32[3,2,8,32], index: 15, kind: output, shape index: {}]
  %s16 = sld [smem:[#allocation0]]
  $region93: #{causal_transformer_forward.1} parent=0
    _
  %s18 = ssub.s32 1, %s16
  %s19 = scalar_select 0, %s18, %s16
  loop: start=0, step=1, limit=5
  $region2: #{causal_transformer_forward.1} parent=0 // loop_pre_header
    _
  $region3: #{causal_transformer_forward.1} parent=0 // loop_header
    %s21 = sphi 0, %s25
    %p22 = scmp.ge.s32.totalorder %s21, 5
    %s28 = sphi 0, %s40
    %s29 = sphi 0, %s36
    %s30 = sphi 0, %s28
    %s31 = sphi 0, %s29
    %s32 = sphi 0, %s30
    %s33 = sphi 0, %s31
    %s45 = sphi 0, %s47
    %s48 = sphi 0, %s45
    %s49 = sphi 0, %s48
    %s65 = sphi 0, %s49
    %s79 = sphi 0, %s81
    %s82 = sphi 0, %s79
    %s83 = sphi 0, %s82
    %s99 = sphi 0, %s83
    %s103 = sphi 0, %s103
    %s105 = sphi 0, %s103
    %s106 = sphi 0, %s105
    %s120 = sphi 0, %s106
    %s126 = sphi 0, %s128
    %s129 = sphi 0, %s126
    %s130 = sphi 0, %s129
    %s146 = sphi 0, %s130
    %s152 = sphi 0, %s154
    %s155 = sphi 0, %s152
    %s156 = sphi 0, %s155
    %s172 = sphi 0, %s156
    %s178 = sphi 0, %s180
    %s181 = sphi 0, %s178
    %s182 = sphi 0, %s181
    %s198 = sphi 0, %s182
    %s204 = sphi 0, %s206
    %s207 = sphi 0, %s204
    %s208 = sphi 0, %s207
    %s224 = sphi 0, %s208
    %s230 = sphi 0, %s232
    %s233 = sphi 0, %s230
    %s234 = sphi 0, %s233
    %s250 = sphi 0, %s234
    %s256 = sphi 0, %s258
    %s259 = sphi 0, %s256
    %s260 = sphi 0, %s259
    %s276 = sphi 0, %s260
    %s282 = sphi 0, %s284
    %s285 = sphi 0, %s282
    %s286 = sphi 0, %s285
    %s302 = sphi 0, %s286
    %s308 = sphi 0, %s310
    %s311 = sphi 0, %s308
    %s312 = sphi 0, %s311
    %s328 = sphi 0, %s312
    %s334 = sphi 0, %s336
    %s337 = sphi 0, %s334
    %s338 = sphi 0, %s337
    %s354 = sphi 0, %s338
    %s360 = sphi 0, %s362
    %s363 = sphi 0, %s360
    %s364 = sphi 0, %s363
    %s380 = sphi 0, %s364
    %s386 = sphi 0, %s388
    %s389 = sphi 0, %s386
    %s390 = sphi 0, %s389
    %s406 = sphi 0, %s390
    %s412 = sphi 0, %s414
    %s415 = sphi 0, %s412
    %s416 = sphi 0, %s415
    %s432 = sphi 0, %s416
    %s440 = sphi 0, %s442
    %s443 = sphi 0, %s440
    %s444 = sphi 0, %s443
    %s460 = sphi 0, %s444
  $region4: #{causal_transformer_forward.1} parent=0 // loop_header_branch
    %24 = sbr.rel (%p22) target = $region8
  $region5: #{causal_transformer_forward.1} parent=0 // loop_body
    %s26 = ssub.s32 %s21, 1
    %s27 = ssub.s32 %s21, 2
    %s34 = sadd.s32 1, %s29
    %p35 = scmp.ge.s32.totalorder %s34, 1
    %s36 = scalar_select %p35, 0, %s34
    %s37 = sadd.s32 1, %s28
    %s38 = scalar_select %p35, %s37, %s28
    %p39 = scmp.ge.s32.totalorder %s38, 3
    %s40 = scalar_select %p39, 0, %s38
    %s41 = ssub.s32 %s28, %s40
    %s42 = ssub.s32 %s29, %s36
    %s43 = sor.u32 %s41, %s42
    %p44 = scmp.eq.s32.totalorder %s43, 0
    %s46 = sadd.s32 %s45, 1
    %s47 = scalar_select %p44, %s45, %s46
    %p50 = pneg %p44
    %p51 = scmp.eq.s32.totalorder %s21, 2
    %p52 = por %p50, %p51
    %p53 = scmp.ne.s32.totalorder %s45, %s48
    %p54 = scmp.eq.s32.totalorder %s21, 0
    %p55 = por %p53, %p54
    %p56 = scmp.ne.s32.totalorder %s45, %s48
    %p57 = scmp.eq.s32.totalorder %s26, 2
    %p58 = por %p56, %p57
    %p59 = scmp.ne.s32.totalorder %s48, %s49
    %p60 = scmp.eq.s32.totalorder %s26, 0
    %p61 = por %p59, %p60
    %p62 = scmp.ne.s32.totalorder %s48, %s49
    %p63 = scmp.eq.s32.totalorder %s27, 2
    %p64 = por %p62, %p63
    %p66 = scmp.ne.s32.totalorder %s49, %s65
    %p67 = scmp.eq.s32.totalorder %s27, 0
    %p68 = por %p66, %p67
    %p69 = scmp.eq.s32.totalorder %s28, 0
    %s70 = ssub.s32 %s28, 1
    %s71 = scalar_select %p69, 2, %s70
    %p72 = scmp.eq.s32.totalorder %s40, 0
    %s73 = ssub.s32 %s40, 1
    %s74 = scalar_select %p72, 2, %s73
    %s75 = ssub.s32 %s71, %s74
    %s76 = ssub.s32 %s29, %s36
    %s77 = sor.u32 %s75, %s76
    %p78 = scmp.eq.s32.totalorder %s77, 0
    %s80 = sadd.s32 %s79, 1
    %s81 = scalar_select %p78, %s79, %s80
    %p84 = pneg %p78
    %p85 = scmp.eq.s32.totalorder %s21, 2
    %p86 = por %p84, %p85
    %p87 = scmp.ne.s32.totalorder %s79, %s82
    %p88 = scmp.eq.s32.totalorder %s21, 0
    %p89 = por %p87, %p88
    %p90 = scmp.ne.s32.totalorder %s79, %s82
    %p91 = scmp.eq.s32.totalorder %s26, 2
    %p92 = por %p90, %p91
    %p93 = scmp.ne.s32.totalorder %s82, %s83
    %p94 = scmp.eq.s32.totalorder %s26, 0
    %p95 = por %p93, %p94
    %p96 = scmp.ne.s32.totalorder %s82, %s83
    %p97 = scmp.eq.s32.totalorder %s27, 2
    %p98 = por %p96, %p97
    %p100 = scmp.ne.s32.totalorder %s83, %s99
    %p101 = scmp.eq.s32.totalorder %s27, 0
    %p102 = por %p100, %p101
    %s104 = sadd.s32 %s103, 1
    %p107 = scmp.eq.s32.totalorder %s21, 2
    %p108 = scmp.ne.s32.totalorder %s103, %s105
    %p109 = scmp.eq.s32.totalorder %s21, 0
    %p110 = por %p108, %p109
    %p111 = scmp.ne.s32.totalorder %s103, %s105
    %p112 = scmp.eq.s32.totalorder %s26, 2
    %p113 = por %p111, %p112
    %p114 = scmp.ne.s32.totalorder %s105, %s106
    %p115 = scmp.eq.s32.totalorder %s26, 0
    %p116 = por %p114, %p115
    %p117 = scmp.ne.s32.totalorder %s105, %s106
    %p118 = scmp.eq.s32.totalorder %s27, 2
    %p119 = por %p117, %p118
    %p121 = scmp.ne.s32.totalorder %s106, %s120
    %p122 = scmp.eq.s32.totalorder %s27, 0
    %p123 = por %p121, %p122
    %s124 = ssub.s32 %s28, %s40
    %p125 = scmp.eq.s32.totalorder %s124, 0
    %s127 = sadd.s32 %s126, 1
    %s128 = scalar_select %p125, %s126, %s127
    %p131 = pneg %p125
    %p132 = scmp.eq.s32.totalorder %s21, 2
    %p133 = por %p131, %p132
    %p134 = scmp.ne.s32.totalorder %s126, %s129
    %p135 = scmp.eq.s32.totalorder %s21, 0
    %p136 = por %p134, %p135
    %p137 = scmp.ne.s32.totalorder %s126, %s129
    %p138 = scmp.eq.s32.totalorder %s26, 2
    %p139 = por %p137, %p138
    %p140 = scmp.ne.s32.totalorder %s129, %s130
    %p141 = scmp.eq.s32.totalorder %s26, 0
    %p142 = por %p140, %p141
    %p143 = scmp.ne.s32.totalorder %s129, %s130
    %p144 = scmp.eq.s32.totalorder %s27, 2
    %p145 = por %p143, %p144
    %p147 = scmp.ne.s32.totalorder %s130, %s146
    %p148 = scmp.eq.s32.totalorder %s27, 0
    %p149 = por %p147, %p148
    %s150 = ssub.s32 %s28, %s40
    %p151 = scmp.eq.s32.totalorder %s150, 0
    %s153 = sadd.s32 %s152, 1
    %s154 = scalar_select %p151, %s152, %s153
    %p157 = pneg %p151
    %p158 = scmp.eq.s32.totalorder %s21, 2
    %p159 = por %p157, %p158
    %p160 = scmp.ne.s32.totalorder %s152, %s155
    %p161 = scmp.eq.s32.totalorder %s21, 0
    %p162 = por %p160, %p161
    %p163 = scmp.ne.s32.totalorder %s152, %s155
    %p164 = scmp.eq.s32.totalorder %s26, 2
    %p165 = por %p163, %p164
    %p166 = scmp.ne.s32.totalorder %s155, %s156
    %p167 = scmp.eq.s32.totalorder %s26, 0
    %p168 = por %p166, %p167
    %p169 = scmp.ne.s32.totalorder %s155, %s156
    %p170 = scmp.eq.s32.totalorder %s27, 2
    %p171 = por %p169, %p170
    %p173 = scmp.ne.s32.totalorder %s156, %s172
    %p174 = scmp.eq.s32.totalorder %s27, 0
    %p175 = por %p173, %p174
    %s176 = ssub.s32 %s28, %s40
    %p177 = scmp.eq.s32.totalorder %s176, 0
    %s179 = sadd.s32 %s178, 1
    %s180 = scalar_select %p177, %s178, %s179
    %p183 = pneg %p177
    %p184 = scmp.eq.s32.totalorder %s21, 2
    %p185 = por %p183, %p184
    %p186 = scmp.ne.s32.totalorder %s178, %s181
    %p187 = scmp.eq.s32.totalorder %s21, 0
    %p188 = por %p186, %p187
    %p189 = scmp.ne.s32.totalorder %s178, %s181
    %p190 = scmp.eq.s32.totalorder %s26, 2
    %p191 = por %p189, %p190
    %p192 = scmp.ne.s32.totalorder %s181, %s182
    %p193 = scmp.eq.s32.totalorder %s26, 0
    %p194 = por %p192, %p193
    %p195 = scmp.ne.s32.totalorder %s181, %s182
    %p196 = scmp.eq.s32.totalorder %s27, 2
    %p197 = por %p195, %p196
    %p199 = scmp.ne.s32.totalorder %s182, %s198
    %p200 = scmp.eq.s32.totalorder %s27, 0
    %p201 = por %p199, %p200
    %s202 = ssub.s32 %s28, %s40
    %p203 = scmp.eq.s32.totalorder %s202, 0
    %s205 = sadd.s32 %s204, 1
    %s206 = scalar_select %p203, %s204, %s205
    %p209 = pneg %p203
    %p210 = scmp.eq.s32.totalorder %s21, 2
    %p211 = por %p209, %p210
    %p212 = scmp.ne.s32.totalorder %s204, %s207
    %p213 = scmp.eq.s32.totalorder %s21, 0
    %p214 = por %p212, %p213
    %p215 = scmp.ne.s32.totalorder %s204, %s207
    %p216 = scmp.eq.s32.totalorder %s26, 2
    %p217 = por %p215, %p216
    %p218 = scmp.ne.s32.totalorder %s207, %s208
    %p219 = scmp.eq.s32.totalorder %s26, 0
    %p220 = por %p218, %p219
    %p221 = scmp.ne.s32.totalorder %s207, %s208
    %p222 = scmp.eq.s32.totalorder %s27, 2
    %p223 = por %p221, %p222
    %p225 = scmp.ne.s32.totalorder %s208, %s224
    %p226 = scmp.eq.s32.totalorder %s27, 0
    %p227 = por %p225, %p226
    %s228 = ssub.s32 %s28, %s40
    %p229 = scmp.eq.s32.totalorder %s228, 0
    %s231 = sadd.s32 %s230, 1
    %s232 = scalar_select %p229, %s230, %s231
    %p235 = pneg %p229
    %p236 = scmp.eq.s32.totalorder %s21, 2
    %p237 = por %p235, %p236
    %p238 = scmp.ne.s32.totalorder %s230, %s233
    %p239 = scmp.eq.s32.totalorder %s21, 0
    %p240 = por %p238, %p239
    %p241 = scmp.ne.s32.totalorder %s230, %s233
    %p242 = scmp.eq.s32.totalorder %s26, 2
    %p243 = por %p241, %p242
    %p244 = scmp.ne.s32.totalorder %s233, %s234
    %p245 = scmp.eq.s32.totalorder %s26, 0
    %p246 = por %p244, %p245
    %p247 = scmp.ne.s32.totalorder %s233, %s234
    %p248 = scmp.eq.s32.totalorder %s27, 2
    %p249 = por %p247, %p248
    %p251 = scmp.ne.s32.totalorder %s234, %s250
    %p252 = scmp.eq.s32.totalorder %s27, 0
    %p253 = por %p251, %p252
    %s254 = ssub.s32 %s28, %s40
    %p255 = scmp.eq.s32.totalorder %s254, 0
    %s257 = sadd.s32 %s256, 1
    %s258 = scalar_select %p255, %s256, %s257
    %p261 = pneg %p255
    %p262 = scmp.eq.s32.totalorder %s21, 2
    %p263 = por %p261, %p262
    %p264 = scmp.ne.s32.totalorder %s256, %s259
    %p265 = scmp.eq.s32.totalorder %s21, 0
    %p266 = por %p264, %p265
    %p267 = scmp.ne.s32.totalorder %s256, %s259
    %p268 = scmp.eq.s32.totalorder %s26, 2
    %p269 = por %p267, %p268
    %p270 = scmp.ne.s32.totalorder %s259, %s260
    %p271 = scmp.eq.s32.totalorder %s26, 0
    %p272 = por %p270, %p271
    %p273 = scmp.ne.s32.totalorder %s259, %s260
    %p274 = scmp.eq.s32.totalorder %s27, 2
    %p275 = por %p273, %p274
    %p277 = scmp.ne.s32.totalorder %s260, %s276
    %p278 = scmp.eq.s32.totalorder %s27, 0
    %p279 = por %p277, %p278
    %s280 = ssub.s32 %s28, %s40
    %p281 = scmp.eq.s32.totalorder %s280, 0
    %s283 = sadd.s32 %s282, 1
    %s284 = scalar_select %p281, %s282, %s283
    %p287 = pneg %p281
    %p288 = scmp.eq.s32.totalorder %s21, 2
    %p289 = por %p287, %p288
    %p290 = scmp.ne.s32.totalorder %s282, %s285
    %p291 = scmp.eq.s32.totalorder %s21, 0
    %p292 = por %p290, %p291
    %p293 = scmp.ne.s32.totalorder %s282, %s285
    %p294 = scmp.eq.s32.totalorder %s26, 2
    %p295 = por %p293, %p294
    %p296 = scmp.ne.s32.totalorder %s285, %s286
    %p297 = scmp.eq.s32.totalorder %s26, 0
    %p298 = por %p296, %p297
    %p299 = scmp.ne.s32.totalorder %s285, %s286
    %p300 = scmp.eq.s32.totalorder %s27, 2
    %p301 = por %p299, %p300
    %p303 = scmp.ne.s32.totalorder %s286, %s302
    %p304 = scmp.eq.s32.totalorder %s27, 0
    %p305 = por %p303, %p304
    %s306 = ssub.s32 %s28, %s40
    %p307 = scmp.eq.s32.totalorder %s306, 0
    %s309 = sadd.s32 %s308, 1
    %s310 = scalar_select %p307, %s308, %s309
    %p313 = pneg %p307
    %p314 = scmp.eq.s32.totalorder %s21, 2
    %p315 = por %p313, %p314
    %p316 = scmp.ne.s32.totalorder %s308, %s311
    %p317 = scmp.eq.s32.totalorder %s21, 0
    %p318 = por %p316, %p317
    %p319 = scmp.ne.s32.totalorder %s308, %s311
    %p320 = scmp.eq.s32.totalorder %s26, 2
    %p321 = por %p319, %p320
    %p322 = scmp.ne.s32.totalorder %s311, %s312
    %p323 = scmp.eq.s32.totalorder %s26, 0
    %p324 = por %p322, %p323
    %p325 = scmp.ne.s32.totalorder %s311, %s312
    %p326 = scmp.eq.s32.totalorder %s27, 2
    %p327 = por %p325, %p326
    %p329 = scmp.ne.s32.totalorder %s312, %s328
    %p330 = scmp.eq.s32.totalorder %s27, 0
    %p331 = por %p329, %p330
    %s332 = ssub.s32 %s28, %s40
    %p333 = scmp.eq.s32.totalorder %s332, 0
    %s335 = sadd.s32 %s334, 1
    %s336 = scalar_select %p333, %s334, %s335
    %p339 = pneg %p333
    %p340 = scmp.eq.s32.totalorder %s21, 2
    %p341 = por %p339, %p340
    %p342 = scmp.ne.s32.totalorder %s334, %s337
    %p343 = scmp.eq.s32.totalorder %s21, 0
    %p344 = por %p342, %p343
    %p345 = scmp.ne.s32.totalorder %s334, %s337
    %p346 = scmp.eq.s32.totalorder %s26, 2
    %p347 = por %p345, %p346
    %p348 = scmp.ne.s32.totalorder %s337, %s338
    %p349 = scmp.eq.s32.totalorder %s26, 0
    %p350 = por %p348, %p349
    %p351 = scmp.ne.s32.totalorder %s337, %s338
    %p352 = scmp.eq.s32.totalorder %s27, 2
    %p353 = por %p351, %p352
    %p355 = scmp.ne.s32.totalorder %s338, %s354
    %p356 = scmp.eq.s32.totalorder %s27, 0
    %p357 = por %p355, %p356
    %s358 = ssub.s32 %s28, %s40
    %p359 = scmp.eq.s32.totalorder %s358, 0
    %s361 = sadd.s32 %s360, 1
    %s362 = scalar_select %p359, %s360, %s361
    %p365 = pneg %p359
    %p366 = scmp.eq.s32.totalorder %s21, 2
    %p367 = por %p365, %p366
    %p368 = scmp.ne.s32.totalorder %s360, %s363
    %p369 = scmp.eq.s32.totalorder %s21, 0
    %p370 = por %p368, %p369
    %p371 = scmp.ne.s32.totalorder %s360, %s363
    %p372 = scmp.eq.s32.totalorder %s26, 2
    %p373 = por %p371, %p372
    %p374 = scmp.ne.s32.totalorder %s363, %s364
    %p375 = scmp.eq.s32.totalorder %s26, 0
    %p376 = por %p374, %p375
    %p377 = scmp.ne.s32.totalorder %s363, %s364
    %p378 = scmp.eq.s32.totalorder %s27, 2
    %p379 = por %p377, %p378
    %p381 = scmp.ne.s32.totalorder %s364, %s380
    %p382 = scmp.eq.s32.totalorder %s27, 0
    %p383 = por %p381, %p382
    %s384 = ssub.s32 %s28, %s40
    %p385 = scmp.eq.s32.totalorder %s384, 0
    %s387 = sadd.s32 %s386, 1
    %s388 = scalar_select %p385, %s386, %s387
    %p391 = pneg %p385
    %p392 = scmp.eq.s32.totalorder %s21, 2
    %p393 = por %p391, %p392
    %p394 = scmp.ne.s32.totalorder %s386, %s389
    %p395 = scmp.eq.s32.totalorder %s21, 0
    %p396 = por %p394, %p395
    %p397 = scmp.ne.s32.totalorder %s386, %s389
    %p398 = scmp.eq.s32.totalorder %s26, 2
    %p399 = por %p397, %p398
    %p400 = scmp.ne.s32.totalorder %s389, %s390
    %p401 = scmp.eq.s32.totalorder %s26, 0
    %p402 = por %p400, %p401
    %p403 = scmp.ne.s32.totalorder %s389, %s390
    %p404 = scmp.eq.s32.totalorder %s27, 2
    %p405 = por %p403, %p404
    %p407 = scmp.ne.s32.totalorder %s390, %s406
    %p408 = scmp.eq.s32.totalorder %s27, 0
    %p409 = por %p407, %p408
    %s410 = ssub.s32 %s28, %s40
    %p411 = scmp.eq.s32.totalorder %s410, 0
    %s413 = sadd.s32 %s412, 1
    %s414 = scalar_select %p411, %s412, %s413
    %p417 = pneg %p411
    %p418 = scmp.eq.s32.totalorder %s21, 2
    %p419 = por %p417, %p418
    %p420 = scmp.ne.s32.totalorder %s412, %s415
    %p421 = scmp.eq.s32.totalorder %s21, 0
    %p422 = por %p420, %p421
    %p423 = scmp.ne.s32.totalorder %s412, %s415
    %p424 = scmp.eq.s32.totalorder %s26, 2
    %p425 = por %p423, %p424
    %p426 = scmp.ne.s32.totalorder %s415, %s416
    %p427 = scmp.eq.s32.totalorder %s26, 0
    %p428 = por %p426, %p427
    %p429 = scmp.ne.s32.totalorder %s415, %s416
    %p430 = scmp.eq.s32.totalorder %s27, 2
    %p431 = por %p429, %p430
    %p433 = scmp.ne.s32.totalorder %s416, %s432
    %p434 = scmp.eq.s32.totalorder %s27, 0
    %p435 = por %p433, %p434
    %s436 = ssub.s32 %s28, %s40
    %s437 = ssub.s32 %s29, %s36
    %s438 = sor.u32 %s436, %s437
    %p439 = scmp.eq.s32.totalorder %s438, 0
    %s441 = sadd.s32 %s440, 1
    %s442 = scalar_select %p439, %s440, %s441
    %p445 = pneg %p439
    %p446 = scmp.eq.s32.totalorder %s21, 2
    %p447 = por %p445, %p446
    %p448 = scmp.ne.s32.totalorder %s440, %s443
    %p449 = scmp.eq.s32.totalorder %s21, 0
    %p450 = por %p448, %p449
    %p451 = scmp.ne.s32.totalorder %s440, %s443
    %p452 = scmp.eq.s32.totalorder %s26, 2
    %p453 = por %p451, %p452
    %p454 = scmp.ne.s32.totalorder %s443, %s444
    %p455 = scmp.eq.s32.totalorder %s26, 0
    %p456 = por %p454, %p455
    %p457 = scmp.ne.s32.totalorder %s443, %s444
    %p458 = scmp.eq.s32.totalorder %s27, 2
    %p459 = por %p457, %p458
    %p461 = scmp.ne.s32.totalorder %s444, %s460
    %p462 = scmp.eq.s32.totalorder %s27, 0
    %p463 = por %p461, %p462
    %p464 = scmp.le.s32.totalorder 1, %s21
    %p465 = scmp.lt.s32.totalorder %s21, 4
    %p466 = pnand %p464, %p465
    %p467 = pneg %p466
    // Predicated region
    $region9: #{causal_transformer_forward.1} parent=5 // pred_check
      _
    $region10: #{causal_transformer_forward.1} parent=5 // pred_check_branch
      %469 = sbr.rel (%p466) target = $region12
    $region11: #{causal_transformer_forward.1} parent=5 // pred_region
      %s470 = ssub.s32 %s21, 1
      // Predicated region
      $region13: #{causal_transformer_forward.1} parent=11 // pred_check
        %p471 = pneg %p116
      $region14: #{causal_transformer_forward.1} parent=11 // pred_check_branch
        %473 = sbr.rel (%p471) target = $region16
      $region15: #{causal_transformer_forward.1} parent=11 // pred_region
        _
      $region16: #{causal_transformer_forward.1} parent=11 // pred_fallthru
        _
    $region12: #{causal_transformer_forward.1} parent=5 // pred_fallthru
      _
    %p474 = scmp.lt.s32.totalorder %s21, 3
    // Predicated region
    $region17: #{causal_transformer_forward.1} parent=5 // pred_check
      %p475 = pneg %p474
    $region18: #{causal_transformer_forward.1} parent=5 // pred_check_branch
      %477 = sbr.rel (%p475) target = $region20
    $region19: #{causal_transformer_forward.1} parent=5 // pred_region
      // Predicated region
      $region21: #{causal_transformer_forward.1} parent=19 // pred_check
        %p478 = pneg %p55
      $region22: #{causal_transformer_forward.1} parent=19 // pred_check_branch
        %480 = sbr.rel (%p478) target = $region24
      $region23: #{causal_transformer_forward.1} parent=19 // pred_region
        %s481 = smul.u32 2, %s29
        %p482 = scmp.lt.s32.totalorder %s28, 2
        %s483 = scalar_select %p482, %s28, 2
        %p484 = scmp.lt.s32.totalorder %s481, 1
        %s485 = scalar_select %p484, %s481, 1
        %s486 = smul.addr %s483, 2
        %s487 = sadd.s32 %s485, %s486
        %s488 = smul.addr %s487, 8
        %s489 = scalar_lea.vmem %s0, %s488
        %s490 = smul.u32 2, %s29
      $region24: #{causal_transformer_forward.1} parent=19 // pred_fallthru
        _
      // Predicated region
      $region25: #{causal_transformer_forward.1} parent=19 // pred_check
        %p491 = pneg %p89
      $region26: #{causal_transformer_forward.1} parent=19 // pred_check_branch
        %493 = sbr.rel (%p491) target = $region28
      $region27: #{causal_transformer_forward.1} parent=19 // pred_region
        %p494 = scmp.eq.s32.totalorder %s28, 0
        %s495 = ssub.s32 %s28, 1
        %s496 = scalar_select %p494, 2, %s495
        %s497 = smul.u32 2, %s29
        %p498 = scmp.lt.s32.totalorder %s496, 2
        %s499 = scalar_select %p498, %s496, 2
        %p500 = scmp.lt.s32.totalorder %s497, 1
        %s501 = scalar_select %p500, %s497, 1
        %s502 = smul.addr %s499, 2
        %s503 = sadd.s32 %s501, %s502
        %s504 = smul.addr %s503, 8
        %s505 = scalar_lea.vmem %s1, %s504
        %p506 = scmp.eq.s32.totalorder %s28, 0
        %s507 = ssub.s32 %s28, 1
        %s508 = scalar_select %p506, 2, %s507
        %s509 = smul.u32 2, %s29
      $region28: #{causal_transformer_forward.1} parent=19 // pred_fallthru
        _
      // Predicated region
      $region29: #{causal_transformer_forward.1} parent=19 // pred_check
        %p510 = pneg %p136
      $region30: #{causal_transformer_forward.1} parent=19 // pred_check_branch
        %512 = sbr.rel (%p510) target = $region32
      $region31: #{causal_transformer_forward.1} parent=19 // pred_region
        %p513 = scmp.lt.s32.totalorder %s28, 2
        %s514 = scalar_select %p513, %s28, 2
        %s515 = smul.addr %s514, 4
        %s516 = smul.addr %s515, 4
        %s517 = scalar_lea.vmem %s3, %s516
      $region32: #{causal_transformer_forward.1} parent=19 // pred_fallthru
        _
      // Predicated region
      $region33: #{causal_transformer_forward.1} parent=19 // pred_check
        %p518 = pneg %p162
      $region34: #{causal_transformer_forward.1} parent=19 // pred_check_branch
        %520 = sbr.rel (%p518) target = $region36
      $region35: #{causal_transformer_forward.1} parent=19 // pred_region
        %p521 = scmp.lt.s32.totalorder %s28, 2
        %s522 = scalar_select %p521, %s28, 2
        %s523 = scalar_lea.vmem %s4, %s522
      $region36: #{causal_transformer_forward.1} parent=19 // pred_fallthru
        _
      // Predicated region
      $region37: #{causal_transformer_forward.1} parent=19 // pred_check
        %p524 = pneg %p188
      $region38: #{causal_transformer_forward.1} parent=19 // pred_check_branch
        %526 = sbr.rel (%p524) target = $region40
      $region39: #{causal_transformer_forward.1} parent=19 // pred_region
        %p527 = scmp.lt.s32.totalorder %s28, 2
        %s528 = scalar_select %p527, %s28, 2
        %s529 = scalar_lea.vmem %s5, %s528
      $region40: #{causal_transformer_forward.1} parent=19 // pred_fallthru
        _
      // Predicated region
      $region41: #{causal_transformer_forward.1} parent=19 // pred_check
        %p530 = pneg %p214
      $region42: #{causal_transformer_forward.1} parent=19 // pred_check_branch
        %532 = sbr.rel (%p530) target = $region44
      $region43: #{causal_transformer_forward.1} parent=19 // pred_region
        %p533 = scmp.lt.s32.totalorder %s28, 2
        %s534 = scalar_select %p533, %s28, 2
        %s535 = smul.addr %s534, 4
        %s536 = smul.addr %s535, 4
        %s537 = scalar_lea.vmem %s6, %s536
      $region44: #{causal_transformer_forward.1} parent=19 // pred_fallthru
        _
      // Predicated region
      $region45: #{causal_transformer_forward.1} parent=19 // pred_check
        %p538 = pneg %p240
      $region46: #{causal_transformer_forward.1} parent=19 // pred_check_branch
        %540 = sbr.rel (%p538) target = $region48
      $region47: #{causal_transformer_forward.1} parent=19 // pred_region
        %p541 = scmp.lt.s32.totalorder %s28, 2
        %s542 = scalar_select %p541, %s28, 2
        %s543 = scalar_lea.vmem %s7, %s542
      $region48: #{causal_transformer_forward.1} parent=19 // pred_fallthru
        _
      // Predicated region
      $region49: #{causal_transformer_forward.1} parent=19 // pred_check
        %p544 = pneg %p266
      $region50: #{causal_transformer_forward.1} parent=19 // pred_check_branch
        %546 = sbr.rel (%p544) target = $region52
      $region51: #{causal_transformer_forward.1} parent=19 // pred_region
        %p547 = scmp.lt.s32.totalorder %s28, 2
        %s548 = scalar_select %p547, %s28, 2
        %s549 = scalar_lea.vmem %s8, %s548
      $region52: #{causal_transformer_forward.1} parent=19 // pred_fallthru
        _
      // Predicated region
      $region53: #{causal_transformer_forward.1} parent=19 // pred_check
        %p550 = pneg %p292
      $region54: #{causal_transformer_forward.1} parent=19 // pred_check_branch
        %552 = sbr.rel (%p550) target = $region56
      $region55: #{causal_transformer_forward.1} parent=19 // pred_region
        %p553 = scmp.lt.s32.totalorder %s28, 2
        %s554 = scalar_select %p553, %s28, 2
        %s555 = smul.addr %s554, 4
        %s556 = smul.addr %s555, 4
        %s557 = scalar_lea.vmem %s9, %s556
      $region56: #{causal_transformer_forward.1} parent=19 // pred_fallthru
        _
      // Predicated region
      $region57: #{causal_transformer_forward.1} parent=19 // pred_check
        %p558 = pneg %p318
      $region58: #{causal_transformer_forward.1} parent=19 // pred_check_branch
        %560 = sbr.rel (%p558) target = $region60
      $region59: #{causal_transformer_forward.1} parent=19 // pred_region
        %p561 = scmp.lt.s32.totalorder %s28, 2
        %s562 = scalar_select %p561, %s28, 2
        %s563 = scalar_lea.vmem %s10, %s562
      $region60: #{causal_transformer_forward.1} parent=19 // pred_fallthru
        _
      // Predicated region
      $region61: #{causal_transformer_forward.1} parent=19 // pred_check
        %p564 = pneg %p344
      $region62: #{causal_transformer_forward.1} parent=19 // pred_check_branch
        %566 = sbr.rel (%p564) target = $region64
      $region63: #{causal_transformer_forward.1} parent=19 // pred_region
        %p567 = scmp.lt.s32.totalorder %s28, 2
        %s568 = scalar_select %p567, %s28, 2
        %s569 = smul.addr %s568, 4
        %s570 = smul.addr %s569, 4
        %s571 = scalar_lea.vmem %s11, %s570
      $region64: #{causal_transformer_forward.1} parent=19 // pred_fallthru
        _
      // Predicated region
      $region65: #{causal_transformer_forward.1} parent=19 // pred_check
        %p572 = pneg %p370
      $region66: #{causal_transformer_forward.1} parent=19 // pred_check_branch
        %574 = sbr.rel (%p572) target = $region68
      $region67: #{causal_transformer_forward.1} parent=19 // pred_region
        %p575 = scmp.lt.s32.totalorder %s28, 2
        %s576 = scalar_select %p575, %s28, 2
        %s577 = scalar_lea.vmem %s12, %s576
      $region68: #{causal_transformer_forward.1} parent=19 // pred_fallthru
        _
      // Predicated region
      $region69: #{causal_transformer_forward.1} parent=19 // pred_check
        %p578 = pneg %p396
      $region70: #{causal_transformer_forward.1} parent=19 // pred_check_branch
        %580 = sbr.rel (%p578) target = $region72
      $region71: #{causal_transformer_forward.1} parent=19 // pred_region
        %p581 = scmp.lt.s32.totalorder %s28, 2
        %s582 = scalar_select %p581, %s28, 2
        %s583 = scalar_lea.vmem %s13, %s582
      $region72: #{causal_transformer_forward.1} parent=19 // pred_fallthru
        _
      // Predicated region
      $region73: #{causal_transformer_forward.1} parent=19 // pred_check
        %p584 = pneg %p422
      $region74: #{causal_transformer_forward.1} parent=19 // pred_check_branch
        %586 = sbr.rel (%p584) target = $region76
      $region75: #{causal_transformer_forward.1} parent=19 // pred_region
        %p587 = scmp.lt.s32.totalorder %s28, 2
        %s588 = scalar_select %p587, %s28, 2
        %s589 = scalar_lea.vmem %s14, %s588
      $region76: #{causal_transformer_forward.1} parent=19 // pred_fallthru
        _
    $region20: #{causal_transformer_forward.1} parent=5 // pred_fallthru
      _
    %p590 = scmp.le.s32.totalorder 1, %s21
    %p591 = scmp.lt.s32.totalorder %s21, 4
    %p592 = pnand %p590, %p591
    %p593 = pneg %p592
    // Predicated region
    $region77: #{causal_transformer_forward.1} parent=5 // pred_check
      _
    $region78: #{causal_transformer_forward.1} parent=5 // pred_check_branch
      %595 = sbr.rel (%p592) target = $region80
    $region79: #{causal_transformer_forward.1} parent=5 // pred_region
      %s596 = ssub.s32 %s21, 1
      %s597 = smul.u32 2, %s31
      %p598 = scmp.lt.s32.totalorder %s30, 2
      %s599 = scalar_select %p598, %s30, 2
      %p600 = scmp.lt.s32.totalorder %s597, 1
      %s601 = scalar_select %p600, %s597, 1
      %s602 = smul.addr %s599, 2
      %s603 = sadd.s32 %s601, %s602
      %s604 = smul.addr %s603, 8
      %s605 = scalar_lea.vmem %s0, %s604
      %p606 = pneg %p61
      %p607 = pneg %p58
      %p608 = scmp.eq.s32.totalorder %s30, 0
      %s609 = ssub.s32 %s30, 1
      %s610 = scalar_select %p608, 2, %s609
      %s611 = smul.u32 2, %s31
      %p612 = scmp.lt.s32.totalorder %s610, 2
      %s613 = scalar_select %p612, %s610, 2
      %p614 = scmp.lt.s32.totalorder %s611, 1
      %s615 = scalar_select %p614, %s611, 1
      %s616 = smul.addr %s613, 2
      %s617 = sadd.s32 %s615, %s616
      %s618 = smul.addr %s617, 8
      %s619 = scalar_lea.vmem %s1, %s618
      %p620 = pneg %p95
      %p621 = pneg %p92
      %p622 = pneg %p116
      %p623 = pneg %p113
      %p624 = scmp.lt.s32.totalorder %s30, 2
      %s625 = scalar_select %p624, %s30, 2
      %s626 = smul.addr %s625, 4
      %s627 = smul.addr %s626, 4
      %s628 = scalar_lea.vmem %s3, %s627
      %p629 = pneg %p142
      %p630 = pneg %p139
      %p631 = scmp.lt.s32.totalorder %s30, 2
      %s632 = scalar_select %p631, %s30, 2
      %s633 = scalar_lea.vmem %s4, %s632
      %p634 = pneg %p168
      %p635 = pneg %p165
      %p636 = scmp.lt.s32.totalorder %s30, 2
      %s637 = scalar_select %p636, %s30, 2
      %s638 = scalar_lea.vmem %s5, %s637
      %p639 = pneg %p194
      %p640 = pneg %p191
      %p641 = scmp.lt.s32.totalorder %s30, 2
      %s642 = scalar_select %p641, %s30, 2
      %s643 = smul.addr %s642, 4
      %s644 = smul.addr %s643, 4
      %s645 = scalar_lea.vmem %s6, %s644
      %p646 = pneg %p220
      %p647 = pneg %p217
      %p648 = scmp.lt.s32.totalorder %s30, 2
      %s649 = scalar_select %p648, %s30, 2
      %s650 = scalar_lea.vmem %s7, %s649
      %p651 = pneg %p246
      %p652 = pneg %p243
      %p653 = scmp.lt.s32.totalorder %s30, 2
      %s654 = scalar_select %p653, %s30, 2
      %s655 = scalar_lea.vmem %s8, %s654
      %p656 = pneg %p272
      %p657 = pneg %p269
      %p658 = scmp.lt.s32.totalorder %s30, 2
      %s659 = scalar_select %p658, %s30, 2
      %s660 = smul.addr %s659, 4
      %s661 = smul.addr %s660, 4
      %s662 = scalar_lea.vmem %s9, %s661
      %p663 = pneg %p298
      %p664 = pneg %p295
      %p665 = scmp.lt.s32.totalorder %s30, 2
      %s666 = scalar_select %p665, %s30, 2
      %s667 = scalar_lea.vmem %s10, %s666
      %p668 = pneg %p324
      %p669 = pneg %p321
      %p670 = scmp.lt.s32.totalorder %s30, 2
      %s671 = scalar_select %p670, %s30, 2
      %s672 = smul.addr %s671, 4
      %s673 = smul.addr %s672, 4
      %s674 = scalar_lea.vmem %s11, %s673
      %p675 = pneg %p350
      %p676 = pneg %p347
      %p677 = scmp.lt.s32.totalorder %s30, 2
      %s678 = scalar_select %p677, %s30, 2
      %s679 = scalar_lea.vmem %s12, %s678
      %p680 = pneg %p376
      %p681 = pneg %p373
      %p682 = scmp.lt.s32.totalorder %s30, 2
      %s683 = scalar_select %p682, %s30, 2
      %s684 = scalar_lea.vmem %s13, %s683
      %p685 = pneg %p402
      %p686 = pneg %p399
      %p687 = scmp.lt.s32.totalorder %s30, 2
      %s688 = scalar_select %p687, %s30, 2
      %s689 = scalar_lea.vmem %s14, %s688
      %p690 = pneg %p428
      %p691 = pneg %p425
      %p692 = pneg %p456
      %p693 = pneg %p453
      %s694 = smul.u32 2, %s31
      %p695 = scmp.lt.s32.totalorder %s30, 2
      %s696 = scalar_select %p695, %s30, 2
      %p697 = scmp.lt.s32.totalorder %s694, 1
      %s698 = scalar_select %p697, %s694, 1
      %s699 = smul.addr %s696, 2
      %s700 = sadd.s32 %s698, %s699
      %s701 = smul.addr %s700, 8
      %s702 = scalar_lea.vmem %s15, %s701
      %s703 = smul.u32 2, %s31
      %p704 = scmp.lt.s32.totalorder %s30, 2
      %s705 = scalar_select %p704, %s30, 2
      %p706 = scmp.lt.s32.totalorder %s703, 1
      %s707 = scalar_select %p706, %s703, 1
      %s708 = smul.addr %s705, 2
      %s709 = sadd.s32 %s707, %s708
      %s710 = smul.addr %s709, 8
      %s711 = scalar_lea.vmem %s0, %s710
      %s712 = smul.u32 2, %s31
      %p713 = scmp.eq.s32.totalorder %s30, 0
      %s714 = ssub.s32 %s30, 1
      %s715 = scalar_select %p713, 2, %s714
      %s716 = smul.u32 2, %s31
      %p717 = scmp.lt.s32.totalorder %s715, 2
      %s718 = scalar_select %p717, %s715, 2
      %p719 = scmp.lt.s32.totalorder %s716, 1
      %s720 = scalar_select %p719, %s716, 1
      %s721 = smul.addr %s718, 2
      %s722 = sadd.s32 %s720, %s721
      %s723 = smul.addr %s722, 8
      %s724 = scalar_lea.vmem %s1, %s723
      %p725 = scmp.eq.s32.totalorder %s30, 0
      %s726 = ssub.s32 %s30, 1
      %s727 = scalar_select %p725, 2, %s726
      %s728 = smul.u32 2, %s31
      %p729 = scmp.lt.s32.totalorder %s30, 2
      %s730 = scalar_select %p729, %s30, 2
      %s731 = smul.addr %s730, 4
      %s732 = smul.addr %s731, 4
      %s733 = scalar_lea.vmem %s3, %s732
      %p734 = scmp.lt.s32.totalorder %s30, 2
      %s735 = scalar_select %p734, %s30, 2
      %s736 = scalar_lea.vmem %s4, %s735
      %p737 = scmp.lt.s32.totalorder %s30, 2
      %s738 = scalar_select %p737, %s30, 2
      %s739 = scalar_lea.vmem %s5, %s738
      %p740 = scmp.lt.s32.totalorder %s30, 2
      %s741 = scalar_select %p740, %s30, 2
      %s742 = smul.addr %s741, 4
      %s743 = smul.addr %s742, 4
      %s744 = scalar_lea.vmem %s6, %s743
      %p745 = scmp.lt.s32.totalorder %s30, 2
      %s746 = scalar_select %p745, %s30, 2
      %s747 = scalar_lea.vmem %s7, %s746
      %p748 = scmp.lt.s32.totalorder %s30, 2
      %s749 = scalar_select %p748, %s30, 2
      %s750 = scalar_lea.vmem %s8, %s749
      %p751 = scmp.lt.s32.totalorder %s30, 2
      %s752 = scalar_select %p751, %s30, 2
      %s753 = smul.addr %s752, 4
      %s754 = smul.addr %s753, 4
      %s755 = scalar_lea.vmem %s9, %s754
      %p756 = scmp.lt.s32.totalorder %s30, 2
      %s757 = scalar_select %p756, %s30, 2
      %s758 = scalar_lea.vmem %s10, %s757
      %p759 = scmp.lt.s32.totalorder %s30, 2
      %s760 = scalar_select %p759, %s30, 2
      %s761 = smul.addr %s760, 4
      %s762 = smul.addr %s761, 4
      %s763 = scalar_lea.vmem %s11, %s762
      %p764 = scmp.lt.s32.totalorder %s30, 2
      %s765 = scalar_select %p764, %s30, 2
      %s766 = scalar_lea.vmem %s12, %s765
      %p767 = scmp.lt.s32.totalorder %s30, 2
      %s768 = scalar_select %p767, %s30, 2
      %s769 = scalar_lea.vmem %s13, %s768
      %p770 = scmp.lt.s32.totalorder %s30, 2
      %s771 = scalar_select %p770, %s30, 2
      %s772 = scalar_lea.vmem %s14, %s771
      %s773 = smul.u32 2, %s31
      %p774 = scmp.lt.s32.totalorder %s30, 2
      %s775 = scalar_select %p774, %s30, 2
      %p776 = scmp.lt.s32.totalorder %s773, 1
      %s777 = scalar_select %p776, %s773, 1
      %s778 = smul.addr %s775, 2
      %s779 = sadd.s32 %s777, %s778
      %s780 = smul.addr %s779, 8
      %s781 = scalar_lea.vmem %s15, %s780
      %s782 = smul.u32 2, %s31
      %v784 = vld [vmem:[%s711] sm:$0xff]
      %v785 = vld [vmem:[%s711 + $0x8] sm:$0xff]
      %v786 = vld [vmem:[%s724] sm:$0xff]
      %v787 = vld [vmem:[%s724 + $0x8] sm:$0xff]
      %v788 = vld [vmem:[%s2] sm:$0xff]
      %v789 = vpack.c.bf16 %v785, %v784
      %v790 = vld [vmem:[%s733] sm:$0xf]
      %v791 = vld [vmem:[%s733 + $0x4] sm:$0xf]
      %v792 = vld [vmem:[%s733 + $0x8] sm:$0xf]
      %v793 = vld [vmem:[%s733 + $0xc] sm:$0xf]
      %v798 = vunpack.c.l.b16 %v790
      %v799 = vunpack.c.l.b16 %v791
      %v800 = vunpack.c.l.b16 %v792
      %v801 = vunpack.c.l.b16 %v793
      %v802 = vpack.c.b16 %v799, %v798
      %v803 = vpack.c.b16 %v801, %v800
      %vm806 = vcmask 261120
      %v808 = vsel %vm806, %v789, 0
      %810 = vmatprep.subr.bf16.mxu0 0
      %811 = vmatpush1.bf16.msra.mxu0 %v802
      %812 = vmatprep.subr.bf16.mxu0 0
      %813 = vmatpush1.bf16.msra.mxu0 %v803
      %814 = vmatprep.subr.bf16.mxu0 0
      %815 = vmatpush1.bf16.msra.mxu0 0
      %816 = vmatprep.subr.bf16.mxu0 0
      %817 = vmatpush1.bf16.msra.mxu0 0
      %818 = vmatprep.subr.bf16.mxu0 0
      %819 = vmatpush1.bf16.msra.mxu0 0
      %820 = vmatprep.subr.bf16.mxu0 0
      %821 = vmatpush1.bf16.msra.mxu0 0
      %822 = vmatprep.subr.bf16.mxu0 0
      %823 = vmatpush1.bf16.msra.mxu0 0
      %824 = vmatprep.subr.bf16.mxu0 0
      %825 = vmatpush1.bf16.msra.mxu0 0
      %826 = vmatprep.subr.bf16.mxu0 0
      %827 = vmatpush1.bf16.msra.mxu0 0
      %828 = vmatprep.subr.bf16.mxu0 0
      %829 = vmatpush1.bf16.msra.mxu0 0
      %830 = vmatprep.subr.bf16.mxu0 0
      %831 = vmatpush1.bf16.msra.mxu0 0
      %832 = vmatprep.subr.bf16.mxu0 0
      %833 = vmatpush1.bf16.msra.mxu0 0
      %834 = vmatprep.subr.bf16.mxu0 0
      %835 = vmatpush1.bf16.msra.mxu0 0
      %836 = vmatprep.subr.bf16.mxu0 0
      %837 = vmatpush1.bf16.msra.mxu0 0
      %838 = vmatprep.subr.bf16.mxu0 0
      %839 = vmatpush1.bf16.msra.mxu0 0
      %840 = vmatprep.subr.bf16.mxu0 0
      %841 = vmatpush1.bf16.msra.mxu0 0
      %842 = vmatprep.mubr.bf16.mxu0 0
      %843 = vmatmul.mubr.bf16.gmra.mrb[0].mxu0 %v808
      %v844 = vpop.f32.mrb[0].mxu0
      %v845 = vadd.f32 0.0, %v844
      %v846 = vpop.f32.mrb[0].mxu0
      %v847 = vpop.f32.mrb[0].mxu0
      %v848 = vadd.f32 0.0, %v847
      %v849 = vpop.f32.mrb[0].mxu0
      %850 = vdwg.mxu0
      %v851 = vadd.f32 %v845, %v788
      %v852 = vadd.f32 %v848, %v788
      %v853 = vld [vmem:[%s736] sm:$0x1]
      %v854 = vld [vmem:[%s739] sm:$0x1]
      %v855 = vsel %vm806, %v851, 0.0
      %856 = vadd.xlane.f32.xlu0 %v855
      %v857 = vpop.xlane.xlu0 %856
      %v858 = vsel %vm806, %v852, 0.0
      %859 = vadd.xlane.f32.xlu0 %v858
      %v860 = vpop.xlane.xlu0 %859
      %v861 = vrcp.pop 32.0
      %v862 = vmul.f32 %v857, %v861
      %v863 = vmul.f32 %v860, %v861
      %v864 = vsub.f32 %v851, %v862
      %v865 = vsub.f32 %v852, %v863
      %v866 = vmul.f32 %v864, %v864
      %v867 = vmul.f32 %v865, %v865
      %v868 = vsel %vm806, %v866, 0.0
      %869 = vadd.xlane.f32.xlu0 %v868
      %v870 = vpop.xlane.xlu0 %869
      %v871 = vsel %vm806, %v867, 0.0
      %872 = vadd.xlane.f32.xlu0 %v871
      %v873 = vpop.xlane.xlu0 %872
      %v874 = vmul.f32 %v870, %v861
      %v875 = vmul.f32 %v873, %v861
      %v876 = vadd.f32 %v874, 1e-05
      %v877 = vadd.f32 %v875, 1e-05
      %v878 = vrsqrt.pop %v876
      %v879 = vrsqrt.pop %v877
      %v880 = vmul.f32 %v864, %v878
      %v881 = vmul.f32 %v865, %v879
      %v883 = vlaneseq
      %v884 = vshrl.u32 %v883, 7
      %v885 = vsub.s32 0, %v884
      %v886 = vrot.slane %v853, %v885
      %v888 = vmul.f32 %v880, %v886
      %v889 = vmul.f32 %v881, %v886
      %v891 = vlaneseq
      %v892 = vshrl.u32 %v891, 7
      %v893 = vsub.s32 0, %v892
      %v894 = vrot.slane %v854, %v893
      %v896 = vadd.f32 %v888, %v894
      %v897 = vadd.f32 %v889, %v894
      %v898 = vadd.f32 %v896, %v845
      %v899 = vadd.f32 %v897, %v848
      %v900 = vpack.c.bf16 %v787, %v786
      %v901 = vld [vmem:[%s744] sm:$0xf]
      %v902 = vld [vmem:[%s744 + $0x4] sm:$0xf]
      %v903 = vld [vmem:[%s744 + $0x8] sm:$0xf]
      %v904 = vld [vmem:[%s744 + $0xc] sm:$0xf]
      %v909 = vunpack.c.l.b16 %v901
      %v910 = vunpack.c.l.b16 %v902
      %v911 = vunpack.c.l.b16 %v903
      %v912 = vunpack.c.l.b16 %v904
      %v913 = vpack.c.b16 %v910, %v909
      %v914 = vpack.c.b16 %v912, %v911
      %v918 = vsel %vm806, %v900, 0
      %920 = vmatprep.subr.bf16.mxu0 0
      %921 = vmatpush1.bf16.msra.mxu0 %v913
      %922 = vmatprep.subr.bf16.mxu0 0
      %923 = vmatpush1.bf16.msra.mxu0 %v914
      %924 = vmatprep.subr.bf16.mxu0 0
      %925 = vmatpush1.bf16.msra.mxu0 0
      %926 = vmatprep.subr.bf16.mxu0 0
      %927 = vmatpush1.bf16.msra.mxu0 0
      %928 = vmatprep.subr.bf16.mxu0 0
      %929 = vmatpush1.bf16.msra.mxu0 0
      %930 = vmatprep.subr.bf16.mxu0 0
      %931 = vmatpush1.bf16.msra.mxu0 0
      %932 = vmatprep.subr.bf16.mxu0 0
      %933 = vmatpush1.bf16.msra.mxu0 0
      %934 = vmatprep.subr.bf16.mxu0 0
      %935 = vmatpush1.bf16.msra.mxu0 0
      %936 = vmatprep.subr.bf16.mxu0 0
      %937 = vmatpush1.bf16.msra.mxu0 0
      %938 = vmatprep.subr.bf16.mxu0 0
      %939 = vmatpush1.bf16.msra.mxu0 0
      %940 = vmatprep.subr.bf16.mxu0 0
      %941 = vmatpush1.bf16.msra.mxu0 0
      %942 = vmatprep.subr.bf16.mxu0 0
      %943 = vmatpush1.bf16.msra.mxu0 0
      %944 = vmatprep.subr.bf16.mxu0 0
      %945 = vmatpush1.bf16.msra.mxu0 0
      %946 = vmatprep.subr.bf16.mxu0 0
      %947 = vmatpush1.bf16.msra.mxu0 0
      %948 = vmatprep.subr.bf16.mxu0 0
      %949 = vmatpush1.bf16.msra.mxu0 0
      %950 = vmatprep.subr.bf16.mxu0 0
      %951 = vmatpush1.bf16.msra.mxu0 0
      %952 = vmatprep.mubr.bf16.mxu0 0
      %953 = vmatmul.mubr.bf16.gmra.mrb[0].mxu0 %v918
      %v954 = vpop.f32.mrb[0].mxu0
      %v955 = vadd.f32 0.0, %v954
      %v956 = vpop.f32.mrb[0].mxu0
      %v957 = vpop.f32.mrb[0].mxu0
      %v958 = vadd.f32 0.0, %v957
      %v959 = vpop.f32.mrb[0].mxu0
      %960 = vdwg.mxu0
      %v961 = vadd.f32 %v955, %v788
      %v962 = vadd.f32 %v958, %v788
      %v963 = vld [vmem:[%s747] sm:$0x1]
      %v964 = vld [vmem:[%s750] sm:$0x1]
      %v965 = vsel %vm806, %v961, 0.0
      %966 = vadd.xlane.f32.xlu0 %v965
      %v967 = vpop.xlane.xlu0 %966
      %v968 = vsel %vm806, %v962, 0.0
      %969 = vadd.xlane.f32.xlu0 %v968
      %v970 = vpop.xlane.xlu0 %969
      %v971 = vmul.f32 %v967, %v861
      %v972 = vmul.f32 %v970, %v861
      %v973 = vsub.f32 %v961, %v971
      %v974 = vsub.f32 %v962, %v972
      %v975 = vmul.f32 %v973, %v973
      %v976 = vmul.f32 %v974, %v974
      %v977 = vsel %vm806, %v975, 0.0
      %978 = vadd.xlane.f32.xlu0 %v977
      %v979 = vpop.xlane.xlu0 %978
      %v980 = vsel %vm806, %v976, 0.0
      %981 = vadd.xlane.f32.xlu0 %v980
      %v982 = vpop.xlane.xlu0 %981
      %v983 = vmul.f32 %v979, %v861
      %v984 = vmul.f32 %v982, %v861
      %v985 = vadd.f32 %v983, 1e-05
      %v986 = vadd.f32 %v984, 1e-05
      %v987 = vrsqrt.pop %v985
      %v988 = vrsqrt.pop %v986
      %v989 = vmul.f32 %v973, %v987
      %v990 = vmul.f32 %v974, %v988
      %v992 = vlaneseq
      %v993 = vshrl.u32 %v992, 7
      %v994 = vsub.s32 0, %v993
      %v995 = vrot.slane %v963, %v994
      %v997 = vmul.f32 %v989, %v995
      %v998 = vmul.f32 %v990, %v995
      %v1000 = vlaneseq
      %v1001 = vshrl.u32 %v1000, 7
      %v1002 = vsub.s32 0, %v1001
      %v1003 = vrot.slane %v964, %v1002
      %v1005 = vadd.f32 %v997, %v1003
      %v1006 = vadd.f32 %v998, %v1003
      %v1007 = vadd.f32 %v1005, %v955
      %v1008 = vadd.f32 %v1006, %v958
      %v1009 = vadd.f32 %v898, %v1007
      %v1010 = vadd.f32 %v899, %v1008
      %v1011 = vpack.c.bf16 %v1010, %v1009
      %v1012 = vld [vmem:[%s755] sm:$0xf]
      %v1013 = vld [vmem:[%s755 + $0x4] sm:$0xf]
      %v1014 = vld [vmem:[%s755 + $0x8] sm:$0xf]
      %v1015 = vld [vmem:[%s755 + $0xc] sm:$0xf]
      %v1016 = vld [vmem:[%s758] sm:$0x1]
      %v1018 = vlaneseq
      %v1019 = vshrl.u32 %v1018, 7
      %v1020 = vsub.s32 0, %v1019
      %v1021 = vrot.slane %v1016, %v1020
      %v1027 = vunpack.c.l.b16 %v1012
      %v1028 = vunpack.c.l.b16 %v1013
      %v1029 = vunpack.c.l.b16 %v1014
      %v1030 = vunpack.c.l.b16 %v1015
      %v1031 = vpack.c.b16 %v1028, %v1027
      %v1032 = vpack.c.b16 %v1030, %v1029
      %v1036 = vsel %vm806, %v1011, 0
      %1038 = vmatprep.subr.bf16.mxu0 0
      %1039 = vmatpush1.bf16.msra.mxu0 %v1031
      %1040 = vmatprep.subr.bf16.mxu0 0
      %1041 = vmatpush1.bf16.msra.mxu0 %v1032
      %1042 = vmatprep.subr.bf16.mxu0 0
      %1043 = vmatpush1.bf16.msra.mxu0 0
      %1044 = vmatprep.subr.bf16.mxu0 0
      %1045 = vmatpush1.bf16.msra.mxu0 0
      %1046 = vmatprep.subr.bf16.mxu0 0
      %1047 = vmatpush1.bf16.msra.mxu0 0
      %1048 = vmatprep.subr.bf16.mxu0 0
      %1049 = vmatpush1.bf16.msra.mxu0 0
      %1050 = vmatprep.subr.bf16.mxu0 0
      %1051 = vmatpush1.bf16.msra.mxu0 0
      %1052 = vmatprep.subr.bf16.mxu0 0
      %1053 = vmatpush1.bf16.msra.mxu0 0
      %1054 = vmatprep.subr.bf16.mxu0 0
      %1055 = vmatpush1.bf16.msra.mxu0 0
      %1056 = vmatprep.subr.bf16.mxu0 0
      %1057 = vmatpush1.bf16.msra.mxu0 0
      %1058 = vmatprep.subr.bf16.mxu0 0
      %1059 = vmatpush1.bf16.msra.mxu0 0
      %1060 = vmatprep.subr.bf16.mxu0 0
      %1061 = vmatpush1.bf16.msra.mxu0 0
      %1062 = vmatprep.subr.bf16.mxu0 0
      %1063 = vmatpush1.bf16.msra.mxu0 0
      %1064 = vmatprep.subr.bf16.mxu0 0
      %1065 = vmatpush1.bf16.msra.mxu0 0
      %1066 = vmatprep.subr.bf16.mxu0 0
      %1067 = vmatpush1.bf16.msra.mxu0 0
      %1068 = vmatprep.subr.bf16.mxu0 0
      %1069 = vmatpush1.bf16.msra.mxu0 0
      %1070 = vmatprep.mubr.bf16.mxu0 0
      %1071 = vmatmul.mubr.bf16.gmra.mrb[0].mxu0 %v1036
      %v1072 = vpop.f32.mrb[0].mxu0
      %v1073 = vadd.f32 %v1021, %v1072
      %v1074 = vpop.f32.mrb[0].mxu0
      %v1075 = vpop.f32.mrb[0].mxu0
      %v1076 = vadd.f32 %v1021, %v1075
      %v1077 = vpop.f32.mrb[0].mxu0
      %1078 = vdwg.mxu0
      %v1079 = vmax.f32 %v1073, 0.0
      %v1080 = vmax.f32 %v1076, 0.0
      %v1081 = vpack.c.bf16 %v1080, %v1079
      %v1082 = vld [vmem:[%s763] sm:$0xf]
      %v1083 = vld [vmem:[%s763 + $0x4] sm:$0xf]
      %v1084 = vld [vmem:[%s763 + $0x8] sm:$0xf]
      %v1085 = vld [vmem:[%s763 + $0xc] sm:$0xf]
      %v1086 = vld [vmem:[%s766] sm:$0x1]
      %v1088 = vlaneseq
      %v1089 = vshrl.u32 %v1088, 7
      %v1090 = vsub.s32 0, %v1089
      %v1091 = vrot.slane %v1086, %v1090
      %v1097 = vunpack.c.l.b16 %v1082
      %v1098 = vunpack.c.l.b16 %v1083
      %v1099 = vunpack.c.l.b16 %v1084
      %v1100 = vunpack.c.l.b16 %v1085
      %v1101 = vpack.c.b16 %v1098, %v1097
      %v1102 = vpack.c.b16 %v1100, %v1099
      %v1106 = vsel %vm806, %v1081, 0
      %1108 = vmatprep.subr.bf16.mxu0 0
      %1109 = vmatpush1.bf16.msra.mxu0 %v1101
      %1110 = vmatprep.subr.bf16.mxu0 0
      %1111 = vmatpush1.bf16.msra.mxu0 %v1102
      %1112 = vmatprep.subr.bf16.mxu0 0
      %1113 = vmatpush1.bf16.msra.mxu0 0
      %1114 = vmatprep.subr.bf16.mxu0 0
      %1115 = vmatpush1.bf16.msra.mxu0 0
      %1116 = vmatprep.subr.bf16.mxu0 0
      %1117 = vmatpush1.bf16.msra.mxu0 0
      %1118 = vmatprep.subr.bf16.mxu0 0
      %1119 = vmatpush1.bf16.msra.mxu0 0
      %1120 = vmatprep.subr.bf16.mxu0 0
      %1121 = vmatpush1.bf16.msra.mxu0 0
      %1122 = vmatprep.subr.bf16.mxu0 0
      %1123 = vmatpush1.bf16.msra.mxu0 0
      %1124 = vmatprep.subr.bf16.mxu0 0
      %1125 = vmatpush1.bf16.msra.mxu0 0
      %1126 = vmatprep.subr.bf16.mxu0 0
      %1127 = vmatpush1.bf16.msra.mxu0 0
      %1128 = vmatprep.subr.bf16.mxu0 0
      %1129 = vmatpush1.bf16.msra.mxu0 0
      %1130 = vmatprep.subr.bf16.mxu0 0
      %1131 = vmatpush1.bf16.msra.mxu0 0
      %1132 = vmatprep.subr.bf16.mxu0 0
      %1133 = vmatpush1.bf16.msra.mxu0 0
      %1134 = vmatprep.subr.bf16.mxu0 0
      %1135 = vmatpush1.bf16.msra.mxu0 0
      %1136 = vmatprep.subr.bf16.mxu0 0
      %1137 = vmatpush1.bf16.msra.mxu0 0
      %1138 = vmatprep.subr.bf16.mxu0 0
      %1139 = vmatpush1.bf16.msra.mxu0 0
      %1140 = vmatprep.mubr.bf16.mxu0 0
      %1141 = vmatmul.mubr.bf16.gmra.mrb[0].mxu0 %v1106
      %v1142 = vpop.f32.mrb[0].mxu0
      %v1143 = vadd.f32 %v1091, %v1142
      %v1144 = vpop.f32.mrb[0].mxu0
      %v1145 = vpop.f32.mrb[0].mxu0
      %v1146 = vadd.f32 %v1091, %v1145
      %v1147 = vpop.f32.mrb[0].mxu0
      %1148 = vdwg.mxu0
      %v1149 = vld [vmem:[%s769] sm:$0x1]
      %v1150 = vld [vmem:[%s772] sm:$0x1]
      %v1151 = vsel %vm806, %v1143, 0.0
      %1152 = vadd.xlane.f32.xlu0 %v1151
      %v1153 = vpop.xlane.xlu0 %1152
      %v1154 = vsel %vm806, %v1146, 0.0
      %1155 = vadd.xlane.f32.xlu0 %v1154
      %v1156 = vpop.xlane.xlu0 %1155
      %v1157 = vmul.f32 %v1153, %v861
      %v1158 = vmul.f32 %v1156, %v861
      %v1159 = vsub.f32 %v1143, %v1157
      %v1160 = vsub.f32 %v1146, %v1158
      %v1161 = vmul.f32 %v1159, %v1159
      %v1162 = vmul.f32 %v1160, %v1160
      %v1163 = vsel %vm806, %v1161, 0.0
      %1164 = vadd.xlane.f32.xlu0 %v1163
      %v1165 = vpop.xlane.xlu0 %1164
      %v1166 = vsel %vm806, %v1162, 0.0
      %1167 = vadd.xlane.f32.xlu0 %v1166
      %v1168 = vpop.xlane.xlu0 %1167
      %v1169 = vmul.f32 %v1165, %v861
      %v1170 = vmul.f32 %v1168, %v861
      %v1171 = vadd.f32 %v1169, 1e-05
      %v1172 = vadd.f32 %v1170, 1e-05
      %v1173 = vrsqrt.pop %v1171
      %v1174 = vrsqrt.pop %v1172
      %v1175 = vmul.f32 %v1159, %v1173
      %v1176 = vmul.f32 %v1160, %v1174
      %v1178 = vlaneseq
      %v1179 = vshrl.u32 %v1178, 7
      %v1180 = vsub.s32 0, %v1179
      %v1181 = vrot.slane %v1149, %v1180
      %v1183 = vmul.f32 %v1175, %v1181
      %v1184 = vmul.f32 %v1176, %v1181
      %v1186 = vlaneseq
      %v1187 = vshrl.u32 %v1186, 7
      %v1188 = vsub.s32 0, %v1187
      %v1189 = vrot.slane %v1150, %v1188
      %v1191 = vadd.f32 %v1183, %v1189
      %v1192 = vadd.f32 %v1184, %v1189
      %1193 = vst.msk [vmem:[%s781] sm:$0xff] %vm806, %v1191
      %1194 = vst.msk [vmem:[%s781 + $0x8] sm:$0xff] %vm806, %v1192
      %s1195 = smul.u32 2, %s31
      %p1196 = scmp.lt.s32.totalorder %s30, 2
      %s1197 = scalar_select %p1196, %s30, 2
      %p1198 = scmp.lt.s32.totalorder %s1195, 1
      %s1199 = scalar_select %p1198, %s1195, 1
      %s1200 = smul.addr %s1197, 2
      %s1201 = sadd.s32 %s1199, %s1200
      %s1202 = smul.addr %s1201, 8
      %s1203 = scalar_lea.vmem %s15, %s1202
      // Predicated region
      $region81: #{causal_transformer_forward.1} parent=79 // pred_check
        %p1204 = pneg %p453
      $region82: #{causal_transformer_forward.1} parent=79 // pred_check_branch
        %1206 = sbr.rel (%p1204) target = $region84
      $region83: #{causal_transformer_forward.1} parent=79 // pred_region
        %s1207 = smul.u32 2, %s31
      $region84: #{causal_transformer_forward.1} parent=79 // pred_fallthru
        _
    $region80: #{causal_transformer_forward.1} parent=5 // pred_fallthru
      _
    %p1208 = scmp.le.s32.totalorder 2, %s21
    // Predicated region
    $region85: #{causal_transformer_forward.1} parent=5 // pred_check
      %p1209 = pneg %p1208
    $region86: #{causal_transformer_forward.1} parent=5 // pred_check_branch
      %1211 = sbr.rel (%p1209) target = $region88
    $region87: #{causal_transformer_forward.1} parent=5 // pred_region
      %s1212 = ssub.s32 %s21, 2
      // Predicated region
      $region89: #{causal_transformer_forward.1} parent=87 // pred_check
        %p1213 = pneg %p459
      $region90: #{causal_transformer_forward.1} parent=87 // pred_check_branch
        %1215 = sbr.rel (%p1213) target = $region92
      $region91: #{causal_transformer_forward.1} parent=87 // pred_region
        %s1216 = smul.u32 2, %s33
        %p1217 = scmp.lt.s32.totalorder %s32, 2
        %s1218 = scalar_select %p1217, %s32, 2
        %p1219 = scmp.lt.s32.totalorder %s1216, 1
        %s1220 = scalar_select %p1219, %s1216, 1
        %s1221 = smul.addr %s1218, 2
        %s1222 = sadd.s32 %s1220, %s1221
        %s1223 = smul.addr %s1222, 8
        %s1224 = scalar_lea.vmem %s15, %s1223
      $region92: #{causal_transformer_forward.1} parent=87 // pred_fallthru
        _
    $region88: #{causal_transformer_forward.1} parent=5 // pred_fallthru
      _
  $region6: #{causal_transformer_forward.1} parent=0 // loop_footer
    %s25 = sadd.s32 1, %s21
  $region7: #{causal_transformer_forward.1} parent=0 // loop_footer_branch
    %20 = sbr.rel target = $region3
  $region8: #{causal_transformer_forward.1} parent=0 // loop_exit
    _

</llo_original>
